<compile_context>
chip_gen: v5e
topology: v5e:2x2
jax: 0.10.0
libtpu: 0.0.40
codegen_flags: <defaults>
</compile_context>

<pallas_src>
import functools
import math

import jax
import jax.numpy as jnp
import numpy as np
from jax import lax
from jax.experimental import pallas as pl
from jax.experimental.pallas import tpu as pltpu

NEG_SLOPE = 0.2                  # GATConv default negative_slope
TM = 128                         # target-row tile; sweep 256 on v6e/v7x for large graphs
VMEM_LIMIT = 32 * 1024 * 1024    # fits every generation's scoped VMEM (v7x: 32 of 64 MiB)


def _round_up(n, m):
    return ((n + m - 1) // m) * m


# ----------------------------------------------------------------------------
# Fused single-head GATConv kernel, row-tiled over target nodes.
#   x_ref   : [Np, Cin]  bf16  artificial-node features (resident, constant index map)
#   w_ref   : [Cin, Cout] bf16 projection weights (resident)
#   vsrc_ref: [1, Cin]   bf16  att_src @ Wᵀ   (a_src[j] = x_j · v_src)
#   vdst_ref: [1, Cin]   bf16  att_dst @ Wᵀ   (a_dst[i] = x_i · v_dst)
#   bias_ref: [1, Cout]  f32
#   adj_ref : [TM, Np]   int8  adjacency rows, adj[target, source] (streamed tile)
#   scratch : h [Np,Cout] bf16, a_src [1,Np] f32, a_dst [Np,1] f32 (persist across steps)
# ----------------------------------------------------------------------------
def _gat_fused_kernel(x_ref, w_ref, vsrc_ref, vdst_ref, bias_ref, adj_ref, o_ref,
                      h_scr, asrc_scr, adst_scr):
    i = pl.program_id(0)
    tm = o_ref.shape[0]

    # One-time projection + logit components into persistent VMEM scratch.
    # Requires the (single) grid axis to be "arbitrary" (sequential) — set below.
    @pl.when(i == 0)
    def _():
        xb = x_ref[...]                                                   # [Np, Cin] bf16
        h_scr[...] = jnp.dot(xb, w_ref[...],
                             preferred_element_type=jnp.float32).astype(jnp.bfloat16)
        # a_src as a [1, Np] row directly (vector-matrix MXU op, no transpose).
        asrc_scr[...] = lax.dot_general(vsrc_ref[...], xb, (((1,), (1,)), ((), ())),
                                        preferred_element_type=jnp.float32)
        # a_dst as an [Np, 1] column via VPU mul + row reduce (safe lowering, done once).
        adst_scr[...] = jnp.sum(xb.astype(jnp.float32)
                                * vdst_ref[...].astype(jnp.float32),
                                axis=1, keepdims=True)

    # Per-tile attention + aggregation.
    row0 = pl.multiple_of(i * tm, tm)
    a_dst_t = adst_scr[pl.ds(row0, tm), :]                                # [TM, 1]
    e = a_dst_t + asrc_scr[...]                                           # [TM, Np] f32
    e = jnp.where(e > 0, e, NEG_SLOPE * e)                                # leaky_relu
    # Exact edge test (any nonzero entry = edge).  NOTE: the compare is kept in f32
    # (one int8->f32 widen) rather than on raw int8 to stay portable across Mosaic
    # mask-layout handling on all generations; the exp below dominates this section.
    adjf = adj_ref[...].astype(jnp.float32)
    e = jnp.where(adjf != 0.0, e, jnp.float32(-1e30))
    m = jnp.max(e, axis=-1, keepdims=True)                                # [TM, 1]
    p = jnp.exp(e - m)                                                    # [TM, Np]
    denom = jnp.maximum(jnp.sum(p, axis=-1, keepdims=True), jnp.float32(1e-20))
    # Aggregate unnormalized on the MXU, normalize per row (alpha never materialized).
    out = jnp.dot(p.astype(jnp.bfloat16), h_scr[...],
                  preferred_element_type=jnp.float32)                     # [TM, Cout]
    o_ref[...] = (out * pl.reciprocal(denom, approx=False)
                  + bias_ref[...]).astype(o_ref.dtype)


def gat_forward(x, w, att_src, att_dst, bias, adj_i8, *, tm=TM):
    """Single-head GATConv forward given a dense 0/1 adjacency (target-major)."""
    n, c_in = x.shape
    c_out = w.shape[1]
    tm = min(tm, _round_up(n, 32))            # 32: int8 sublane packing granularity
    n_pad = _round_up(n, tm)

    x_p = x.astype(jnp.bfloat16)
    if n_pad != n:
        x_p = jnp.pad(x_p, ((0, n_pad - n), (0, 0)))
        adj_p = jnp.pad(adj_i8, ((0, n_pad - n), (0, n_pad - n)))
    else:
        adj_p = adj_i8

    w_b = w.astype(jnp.bfloat16)
    # Hoisted logit projections: att·(xW) = x·(W attᵀ).
    v_src = (att_src @ w.T).astype(jnp.bfloat16)      # [1, Cin]
    v_dst = (att_dst @ w.T).astype(jnp.bfloat16)      # [1, Cin]
    bias_f = bias.astype(jnp.float32).reshape(1, c_out)

    out = pl.pallas_call(
        _gat_fused_kernel,
        out_shape=jax.ShapeDtypeStruct((n_pad, c_out), jnp.float32),
        grid_spec=pltpu.PrefetchScalarGridSpec(
            num_scalar_prefetch=0,
            grid=(n_pad // tm,),
            in_specs=[
                pl.BlockSpec((n_pad, c_in), lambda i: (0, 0)),   # x (resident)
                pl.BlockSpec((c_in, c_out), lambda i: (0, 0)),   # W (resident)
                pl.BlockSpec((1, c_in), lambda i: (0, 0)),       # v_src
                pl.BlockSpec((1, c_in), lambda i: (0, 0)),       # v_dst
                pl.BlockSpec((1, c_out), lambda i: (0, 0)),      # bias
                pl.BlockSpec((tm, n_pad), lambda i: (i, 0)),     # int8 adjacency rows
            ],
            out_specs=pl.BlockSpec((tm, c_out), lambda i: (i, 0)),
            scratch_shapes=[
                pltpu.VMEM((n_pad, c_out), jnp.bfloat16),        # h = x@W
                pltpu.VMEM((1, n_pad), jnp.float32),             # a_src row
                pltpu.VMEM((n_pad, 1), jnp.float32),             # a_dst column
            ],
        ),
        compiler_params=pltpu.CompilerParams(
            # "arbitrary": sequential grid so the step-0 scratch init precedes all uses.
            dimension_semantics=("arbitrary",),
            vmem_limit_bytes=VMEM_LIMIT),
    )(x_p, w_b, v_src, v_dst, bias_f, adj_p)
    return out[:n] if n_pad != n else out


# ----------------------------------------------------------------------------
# Host-side glue mirroring GATModel2fast.forward's artificial-graph build.
# (torch.nonzero over a masked boolean matrix -> data-dependent host preprocessing.)
# ----------------------------------------------------------------------------
def build_artificial_adjacency(edge_index, num_nodes):
    """Returns int8 [num_nodes, num_nodes], adj[target, source] in {0, 1}."""
    ei = np.asarray(edge_index)
    src, dst = ei[0], ei[1]
    keep = src != dst                      # drop original self-loop edges
    src_f = src[keep]                      # artificial node ids = positions in filtered list
    adj = np.zeros((num_nodes, num_nodes), dtype=np.int8)
    same_src = src_f[:, None] == src_f[None, :]
    np.fill_diagonal(same_src, False)
    iu, ju = np.nonzero(np.triu(same_src, k=1))
    adj[ju, iu] = 1                        # artificial edge i -> j (source i, target j), i < j
    np.fill_diagonal(adj, 1)               # GATConv add_self_loops (none exist beforehand)
    return adj


def gat_model(edge_features, edge_index, gat_params):
    adj = jnp.asarray(build_artificial_adjacency(np.asarray(edge_index),
                                                 edge_features.shape[0]))
    return gat_forward(edge_features, gat_params["w"], gat_params["att_src"],
                       gat_params["att_dst"], gat_params["bias"], adj)


# ----------------------------------------------------------------------------
# ScalarMLPFunction: the whole layer stack fused into a single pallas_call.
# All (pre-scaled, bf16) weights resident; layers unrolled in-kernel; SiLU in VMEM.
# ----------------------------------------------------------------------------
def _mlp_fused_kernel(*refs, num_layers):
    x_ref = refs[0]
    w_refs = refs[1:1 + num_layers]
    o_ref = refs[1 + num_layers]
    h = x_ref[...].astype(jnp.bfloat16)
    for layer in range(num_layers):
        y = jnp.dot(h, w_refs[layer][...], preferred_element_type=jnp.float32)
        if layer < num_layers - 1:
            # silu(y) = y * sigmoid(y); exp runs on the EUP, math stays f32 (v5e-safe).
            y = y * (1.0 / (1.0 + jnp.exp(-y)))
            h = y.astype(jnp.bfloat16)
        else:
            o_ref[...] = y.astype(o_ref.dtype)


def scalar_mlp(x, weights, *, nonlin_const, tm=TM):
    n, d_in = x.shape
    num_layers = len(weights)
    d_out = weights[-1].shape[1]

    # Weight scaling matches the torch code exactly: w * (norm_from_last / sqrt(h_in)).
    w_effs = []
    norm_from_last = 1.0
    for layer, w in enumerate(weights):
        h_in = w.shape[0]
        w_effs.append((w * (norm_from_last / math.sqrt(float(h_in)))).astype(jnp.bfloat16))
        if layer < num_layers - 1:
            norm_from_last = nonlin_const

    tm = min(tm, _round_up(n, 16))
    n_pad = _round_up(n, tm)
    x_p = x.astype(jnp.bfloat16)
    if n_pad != n:
        x_p = jnp.pad(x_p, ((0, n_pad - n), (0, 0)))

    out = pl.pallas_call(
        functools.partial(_mlp_fused_kernel, num_layers=num_layers),
        out_shape=jax.ShapeDtypeStruct((n_pad, d_out), jnp.float32),
        grid_spec=pltpu.PrefetchScalarGridSpec(
            num_scalar_prefetch=0,
            grid=(n_pad // tm,),
            in_specs=[pl.BlockSpec((tm, d_in), lambda i: (i, 0))]
                     + [pl.BlockSpec(w.shape, lambda i: (0, 0)) for w in w_effs],
            out_specs=pl.BlockSpec((tm, d_out), lambda i: (i, 0)),
        ),
        compiler_params=pltpu.CompilerParams(
            dimension_semantics=("parallel",),
            vmem_limit_bytes=VMEM_LIMIT),
    )(x_p, *w_effs)
    return out[:n] if n_pad != n else out


def scalar_mlp_gat_forward(data, params):
    out = dict(data)
    out["edge_features"] = gat_model(data["edge_features"], data["edge_index"],
                                     params["gat"])
    out["node_features"] = scalar_mlp(data["node_features"], params["mlp_weights"],
                                      nonlin_const=params["nonlin_const"])
    return out


# ----------------------------------------------------------------------------
# Pure-JAX references (no Pallas) with matching bf16 casts / compute path.
# ----------------------------------------------------------------------------
def gat_reference(x, w, att_src, att_dst, bias, adj_bool):
    xb = x.astype(jnp.bfloat16)
    wb = w.astype(jnp.bfloat16)
    h = jnp.dot(xb, wb, preferred_element_type=jnp.float32).astype(jnp.bfloat16)
    v_src = (att_src @ w.T).astype(jnp.bfloat16)
    v_dst = (att_dst @ w.T).astype(jnp.bfloat16)
    a_src = lax.dot_general(v_src, xb, (((1,), (1,)), ((), ())),
                            preferred_element_type=jnp.float32)           # [1, N]
    a_dst = jnp.sum(xb.astype(jnp.float32) * v_dst.astype(jnp.float32),
                    axis=1, keepdims=True)                                # [N, 1]
    e = a_dst + a_src
    e = jnp.where(e > 0, e, NEG_SLOPE * e)
    e = jnp.where(adj_bool, e, jnp.float32(-1e30))
    m = jnp.max(e, axis=-1, keepdims=True)
    p = jnp.exp(e - m)
    denom = jnp.maximum(jnp.sum(p, axis=-1, keepdims=True), 1e-20)
    out = jnp.dot(p.astype(jnp.bfloat16), h,
                  preferred_element_type=jnp.float32) * (1.0 / denom)
    return out + bias


def mlp_reference(x, weights, nonlin_const):
    h = x.astype(jnp.bfloat16)
    norm = 1.0
    num_layers = len(weights)
    y = None
    for layer, w in enumerate(weights):
        w_eff = (w * (norm / math.sqrt(float(w.shape[0])))).astype(jnp.bfloat16)
        y = jnp.dot(h, w_eff, preferred_element_type=jnp.float32)
        if layer < num_layers - 1:
            y = y * (1.0 / (1.0 + jnp.exp(-y)))
            h = y.astype(jnp.bfloat16)
            norm = nonlin_const
    return y


# ----------------------------------------------------------------------------
# Parameter init helpers.
# ----------------------------------------------------------------------------
def glorot(key, shape):
    fan_in, fan_out = shape[0], shape[-1]
    limit = math.sqrt(6.0 / (fan_in + fan_out))
    return jax.random.uniform(key, shape, jnp.float32, -limit, limit)


def normalize2mom_cst_silu():
    """e3nn normalize2mom constant for SiLU: E_{z~N(0,1)}[silu(z)^2]^(-1/2) (~1.679)."""
    z = np.linspace(-12.0, 12.0, 240001).astype(np.float64)
    dz = z[1] - z[0]
    phi = np.exp(-0.5 * z * z) / np.sqrt(2.0 * np.pi)
    silu = z / (1.0 + np.exp(-z))
    second_moment = float(np.sum(silu * silu * phi) * dz)
    return second_moment ** -0.5


if __name__ == "__main__":
    # Demo shapes (SMALL, lane-dense / MXU-aligned).  The original module hardcodes
    # GATConv(1024, 1024); the kernels are size-agnostic, we demo at 128.
    NUM_NODES = 32          # original graph nodes
    NUM_EDGES = 200         # original edges -> 200 artificial GAT nodes (padded to 256)
    C_EDGE = 128            # GAT in/out channels
    C_NODE = 128            # node-feature width (MLP input dim)
    MLP_LATENT = [256]
    MLP_OUT = 128

    key = jax.random.PRNGKey(0)
    k = jax.random.split(key, 8)

    edge_features = jax.random.normal(k[0], (NUM_EDGES, C_EDGE), jnp.float32)
    edge_index = jax.random.randint(k[1], (2, NUM_EDGES), 0, NUM_NODES, jnp.int32)
    node_features = jax.random.normal(k[2], (NUM_NODES, C_NODE), jnp.float32)

    gat_params = {
        "w": glorot(k[3], (C_EDGE, C_EDGE)),
        "att_src": glorot(k[4], (1, C_EDGE)),
        "att_dst": glorot(k[5], (1, C_EDGE)),
        "bias": 0.1 * jax.random.normal(k[6], (1, C_EDGE), jnp.float32),
    }
    dims = [C_NODE] + MLP_LATENT + [MLP_OUT]
    wkeys = jax.random.split(k[7], len(dims) - 1)
    sqrt3 = math.sqrt(3.0)
    mlp_weights = [jax.random.uniform(wk, (din, dout), jnp.float32, -sqrt3, sqrt3)
                   for wk, din, dout in zip(wkeys, dims[:-1], dims[1:])]
    nonlin_const = normalize2mom_cst_silu()

    params = {"gat": gat_params, "mlp_weights": mlp_weights,
              "nonlin_const": nonlin_const}
    data = {"edge_features": edge_features, "edge_index": edge_index,
            "node_features": node_features}

    out = scalar_mlp_gat_forward(data, params)
    out = jax.tree_util.tree_map(jax.block_until_ready, out)

    # Correctness check against pure-JAX (non-Pallas) references with matched casts.
    adj_np = build_artificial_adjacency(np.asarray(edge_index), NUM_EDGES)
    ref_edge = gat_reference(edge_features, gat_params["w"], gat_params["att_src"],
                             gat_params["att_dst"], gat_params["bias"],
                             jnp.asarray(adj_np != 0))
    ref_node = mlp_reference(node_features, mlp_weights, nonlin_const)
    np.testing.assert_allclose(np.asarray(out["edge_features"]), np.asarray(ref_edge),
                               rtol=2e-3, atol=2e-3)
    np.testing.assert_allclose(np.asarray(out["node_features"]), np.asarray(ref_node),
                               rtol=2e-3, atol=2e-3)

    print("KERNEL_OK")
</pallas_src>

<mosaic_0001>
module attributes {stable_mosaic.version = 11 : i64} {
  func.func @_gat_fused_kernel(%arg0: i32, %arg1: memref<256x128xbf16, #tpu.memory_space<vmem>>, %arg2: memref<128x128xbf16, #tpu.memory_space<vmem>>, %arg3: memref<1x128xbf16, #tpu.memory_space<vmem>>, %arg4: memref<1x128xbf16, #tpu.memory_space<vmem>>, %arg5: memref<1x128xf32, #tpu.memory_space<vmem>>, %arg6: memref<128x256xi8, #tpu.memory_space<vmem>>, %arg7: memref<128x128xf32, #tpu.memory_space<vmem>>, %arg8: memref<256x128xbf16, #tpu.memory_space<vmem>>, %arg9: memref<1x256xf32, #tpu.memory_space<vmem>>, %arg10: memref<256x1xf32, #tpu.memory_space<vmem>>) attributes {dimension_semantics = [#tpu.dimension_semantics<arbitrary>], iteration_bounds = array<i64: 2>, scalar_prefetch = 0 : i64, scratch_operands = 3 : i64, tpu.core_type = #tpu.core_type<tc>, window_params = [{pipeline_mode = #tpu.pipeline_mode<synchronous>, transform_indices = @transform_0, window_bounds = array<i64: 256, 128>}, {pipeline_mode = #tpu.pipeline_mode<synchronous>, transform_indices = @transform_1, window_bounds = array<i64: 128, 128>}, {pipeline_mode = #tpu.pipeline_mode<synchronous>, transform_indices = @transform_2, window_bounds = array<i64: 1, 128>}, {pipeline_mode = #tpu.pipeline_mode<synchronous>, transform_indices = @transform_3, window_bounds = array<i64: 1, 128>}, {pipeline_mode = #tpu.pipeline_mode<synchronous>, transform_indices = @transform_4, window_bounds = array<i64: 1, 128>}, {transform_indices = @transform_5, window_bounds = array<i64: 128, 256>}, {transform_indices = @transform_6, window_bounds = array<i64: 128, 128>}]} {
    %c0_i32 = arith.constant 0 : i32
    %0 = arith.cmpi eq, %arg0, %c0_i32 : i32
    %1 = arith.extui %0 : i1 to i32
    %c0_i32_0 = arith.constant 0 : i32
    %2 = arith.cmpi ne, %1, %c0_i32_0 : i32
    scf.if %2 {
      %c0_18 = arith.constant 0 : index
      %c0_19 = arith.constant 0 : index
      %41 = vector.load %arg1[%c0_18, %c0_19] : memref<256x128xbf16, #tpu.memory_space<vmem>>, vector<256x128xbf16>
      %c0_20 = arith.constant 0 : index
      %c0_21 = arith.constant 0 : index
      %42 = vector.load %arg2[%c0_20, %c0_21] : memref<128x128xbf16, #tpu.memory_space<vmem>>, vector<128x128xbf16>
      %cst_22 = arith.constant dense<0.000000e+00> : vector<256x128xf32>
      %43 = tpu.matmul %41, %42, %cst_22 {dimension_numbers = #tpu.dot_dimension_numbers<[1], [0], [0], [1], [0, 0, 1, 1], [], []>} : vector<256x128xbf16>, vector<128x128xbf16>, vector<256x128xf32> -> vector<256x128xf32>
      %44 = arith.truncf %43 : vector<256x128xf32> to vector<256x128xbf16>
      %c0_23 = arith.constant 0 : index
      %c0_24 = arith.constant 0 : index
      %45 = vector.load %arg8[%c0_23, %c0_24] : memref<256x128xbf16, #tpu.memory_space<vmem>>, vector<256x128xbf16>
      tpu.vector_store %arg8[%c0_23, %c0_24], %44 {strides = array<i32>} : memref<256x128xbf16, #tpu.memory_space<vmem>>, vector<256x128xbf16>,
      %c0_25 = arith.constant 0 : index
      %c0_26 = arith.constant 0 : index
      %46 = vector.load %arg3[%c0_25, %c0_26] : memref<1x128xbf16, #tpu.memory_space<vmem>>, vector<1x128xbf16>
      %cst_27 = arith.constant dense<0.000000e+00> : vector<1x256xf32>
      %47 = tpu.matmul %46, %41, %cst_27 {dimension_numbers = #tpu.dot_dimension_numbers<[1], [1], [0], [0], [0, 0, 1, 0], [], []>} : vector<1x128xbf16>, vector<256x128xbf16>, vector<1x256xf32> -> vector<1x256xf32>
      %c0_28 = arith.constant 0 : index
      %c0_29 = arith.constant 0 : index
      %48 = vector.load %arg9[%c0_28, %c0_29] : memref<1x256xf32, #tpu.memory_space<vmem>>, vector<1x256xf32>
      tpu.vector_store %arg9[%c0_28, %c0_29], %47 {strides = array<i32>} : memref<1x256xf32, #tpu.memory_space<vmem>>, vector<1x256xf32>,
      %49 = arith.extf %41 : vector<256x128xbf16> to vector<256x128xf32>
      %c0_30 = arith.constant 0 : index
      %c0_31 = arith.constant 0 : index
      %50 = vector.load %arg4[%c0_30, %c0_31] : memref<1x128xbf16, #tpu.memory_space<vmem>>, vector<1x128xbf16>
      %51 = arith.extf %50 : vector<1x128xbf16> to vector<1x128xf32>
      %52 = vector.broadcast %51 : vector<1x128xf32> to vector<256x128xf32>
      %53 = arith.mulf %49, %52 : vector<256x128xf32>
      %cst_32 = arith.constant dense<0.000000e+00> : vector<256xf32>
      %54 = vector.multi_reduction <add>, %53, %cst_32 [1] : vector<256x128xf32> to vector<256xf32>
      %55 = vector.shape_cast %54 : vector<256xf32> to vector<256x1xf32>
      %c0_33 = arith.constant 0 : index
      %c0_34 = arith.constant 0 : index
      %56 = vector.load %arg10[%c0_33, %c0_34] : memref<256x1xf32, #tpu.memory_space<vmem>>, vector<256x1xf32>
      tpu.vector_store %arg10[%c0_33, %c0_34], %55 {strides = array<i32>} : memref<256x1xf32, #tpu.memory_space<vmem>>, vector<256x1xf32>,
    } else {
    }
    %c128_i32 = arith.constant 128 : i32
    %3 = arith.muli %arg0, %c128_i32 : i32
    %4 = tpu.assume_multiple %3, 128 : i32
    %5 = arith.index_cast %4 : i32 to index
    %c0 = arith.constant 0 : index
    %6 = vector.load %arg10[%5, %c0] : memref<256x1xf32, #tpu.memory_space<vmem>>, vector<128x1xf32>
    %c0_1 = arith.constant 0 : index
    %c0_2 = arith.constant 0 : index
    %7 = vector.load %arg9[%c0_1, %c0_2] : memref<1x256xf32, #tpu.memory_space<vmem>>, vector<1x256xf32>
    %8 = vector.broadcast %6 : vector<128x1xf32> to vector<128x256xf32>
    %9 = vector.broadcast %7 : vector<1x256xf32> to vector<128x256xf32>
    %10 = arith.addf %8, %9 : vector<128x256xf32>
    %cst = arith.constant 0.000000e+00 : f32
    %11 = vector.broadcast %cst : f32 to vector<128x256xf32>
    %12 = arith.cmpf ogt, %10, %11 : vector<128x256xf32>
    %cst_3 = arith.constant 2.000000e-01 : f32
    %13 = vector.broadcast %cst_3 : f32 to vector<128x256xf32>
    %14 = arith.mulf %13, %10 : vector<128x256xf32>
    %15 = arith.select %12, %10, %14 : vector<128x256xi1>, vector<128x256xf32>
    %c0_4 = arith.constant 0 : index
    %c0_5 = arith.constant 0 : index
    %16 = vector.load %arg6[%c0_4, %c0_5] : memref<128x256xi8, #tpu.memory_space<vmem>>, vector<128x256xi8>
    %17 = arith.sitofp %16 : vector<128x256xi8> to vector<128x256xf32>
    %cst_6 = arith.constant 0.000000e+00 : f32
    %18 = vector.broadcast %cst_6 : f32 to vector<128x256xf32>
    %19 = arith.cmpf one, %17, %18 : vector<128x256xf32>
    %cst_7 = arith.constant -1.000000e+30 : f32
    %20 = vector.broadcast %cst_7 : f32 to vector<128x256xf32>
    %21 = arith.select %19, %15, %20 : vector<128x256xi1>, vector<128x256xf32>
    %cst_8 = arith.constant dense<0xFF800000> : vector<128xf32>
    %22 = vector.multi_reduction <maximumf>, %21, %cst_8 [1] : vector<128x256xf32> to vector<128xf32>
    %23 = vector.shape_cast %22 : vector<128xf32> to vector<128x1xf32>
    %24 = vector.broadcast %23 : vector<128x1xf32> to vector<128x256xf32>
    %25 = arith.subf %21, %24 : vector<128x256xf32>
    %26 = math.exp %25 : vector<128x256xf32>
    %cst_9 = arith.constant dense<0.000000e+00> : vector<128xf32>
    %27 = vector.multi_reduction <add>, %26, %cst_9 [1] : vector<128x256xf32> to vector<128xf32>
    %28 = vector.shape_cast %27 : vector<128xf32> to vector<128x1xf32>
    %cst_10 = arith.constant 9.99999968E-21 : f32
    %29 = vector.broadcast %cst_10 : f32 to vector<128x1xf32>
    %30 = arith.maximumf %28, %29 : vector<128x1xf32>
    %31 = arith.truncf %26 : vector<128x256xf32> to vector<128x256xbf16>
    %c0_11 = arith.constant 0 : index
    %c0_12 = arith.constant 0 : index
    %32 = vector.load %arg8[%c0_11, %c0_12] : memref<256x128xbf16, #tpu.memory_space<vmem>>, vector<256x128xbf16>
    %cst_13 = arith.constant dense<0.000000e+00> : vector<128x128xf32>
    %33 = tpu.matmul %31, %32, %cst_13 {dimension_numbers = #tpu.dot_dimension_numbers<[1], [0], [0], [1], [0, 0, 1, 1], [], []>} : vector<128x256xbf16>, vector<256x128xbf16>, vector<128x128xf32> -> vector<128x128xf32>
    %34 = tpu.reciprocal %30 : vector<128x1xf32> -> vector<128x1xf32>
    %35 = vector.broadcast %34 : vector<128x1xf32> to vector<128x128xf32>
    %36 = arith.mulf %33, %35 : vector<128x128xf32>
    %c0_14 = arith.constant 0 : index
    %c0_15 = arith.constant 0 : index
    %37 = vector.load %arg5[%c0_14, %c0_15] : memref<1x128xf32, #tpu.memory_space<vmem>>, vector<1x128xf32>
    %38 = vector.broadcast %37 : vector<1x128xf32> to vector<128x128xf32>
    %39 = arith.addf %36, %38 : vector<128x128xf32>
    %c0_16 = arith.constant 0 : index
    %c0_17 = arith.constant 0 : index
    %40 = vector.load %arg7[%c0_16, %c0_17] : memref<128x128xf32, #tpu.memory_space<vmem>>, vector<128x128xf32>
    tpu.vector_store %arg7[%c0_16, %c0_17], %39 {strides = array<i32>} : memref<128x128xf32, #tpu.memory_space<vmem>>, vector<128x128xf32>,
    return
  }
  func.func @transform_0(%arg0: i32) -> (i32, i32) {
    %c0_i32 = arith.constant 0 : i32
    %c0_i32_0 = arith.constant 0 : i32
    %c0_i32_1 = arith.constant 0 : i32
    return %c0_i32, %c0_i32_0 : i32, i32
  }
  func.func @transform_1(%arg0: i32) -> (i32, i32) {
    %c0_i32 = arith.constant 0 : i32
    %c0_i32_0 = arith.constant 0 : i32
    %c0_i32_1 = arith.constant 0 : i32
    return %c0_i32, %c0_i32_0 : i32, i32
  }
  func.func @transform_2(%arg0: i32) -> (i32, i32) {
    %c0_i32 = arith.constant 0 : i32
    %c0_i32_0 = arith.constant 0 : i32
    %c0_i32_1 = arith.constant 0 : i32
    return %c0_i32, %c0_i32_0 : i32, i32
  }
  func.func @transform_3(%arg0: i32) -> (i32, i32) {
    %c0_i32 = arith.constant 0 : i32
    %c0_i32_0 = arith.constant 0 : i32
    %c0_i32_1 = arith.constant 0 : i32
    return %c0_i32, %c0_i32_0 : i32, i32
  }
  func.func @transform_4(%arg0: i32) -> (i32, i32) {
    %c0_i32 = arith.constant 0 : i32
    %c0_i32_0 = arith.constant 0 : i32
    %c0_i32_1 = arith.constant 0 : i32
    return %c0_i32, %c0_i32_0 : i32, i32
  }
  func.func @transform_5(%arg0: i32) -> (i32, i32) {
    %c0_i32 = arith.constant 0 : i32
    %c0_i32_0 = arith.constant 0 : i32
    return %arg0, %c0_i32 : i32, i32
  }
  func.func @transform_6(%arg0: i32) -> (i32, i32) {
    %c0_i32 = arith.constant 0 : i32
    %c0_i32_0 = arith.constant 0 : i32
    return %arg0, %c0_i32 : i32, i32
  }
}

</mosaic_0001>

<llo_original>
// kernel: tpu_custom_call.1
$region0: #{tpu_custom_call.1}
  #allocation0 [shape = 'u32[]', space=smem, size = 0x4, offset = 0x4, fixed_abs, tag = 'smem constant byte address 0x4 - core index']
  #allocation1 [shape = 'u32[72,128]{1,0:T(1,128)}', space=vmem, size = 0x9000, scoped, tag = 'internal scratch']
  #allocation2 [shape = 'bf16[256,128]{1,0:T(8,128)(2,1)}', space=vmem, size = 0x10000, scoped, tag = 'scratch operand']
  #allocation3 [shape = 'f32[1,256]{1,0:T(1,128)}', space=vmem, size = 0x400, scoped, tag = 'scratch operand']
  #allocation4 [shape = 'f32[256,1]{1,0:T(8,128)}', space=vmem, size = 0x20000, scoped, tag = 'scratch operand']
  %s0 = inlined_call_operand.hbm [shape: bf16[256,128], index: 0, kind: input, shape index: {}]
  %s1 = inlined_call_operand.hbm [shape: bf16[128,128], index: 1, kind: input, shape index: {}]
  %s2 = inlined_call_operand.vmem [shape: bf16[1,128], index: 2, kind: input, shape index: {}]
  %s3 = inlined_call_operand.vmem [shape: bf16[1,128], index: 3, kind: input, shape index: {}]
  %s4 = inlined_call_operand.vmem [shape: f32[1,128], index: 4, kind: input, shape index: {}]
  %s5 = inlined_call_operand.hbm [shape: s8[256,256], index: 5, kind: input, shape index: {}]
  %s6 = inlined_call_operand.hbm [shape: f32[256,128], index: 6, kind: output, shape index: {}]
  %s7 = sld [smem:[#allocation0]]
  $region73: #{tpu_custom_call.1} parent=0
    _
  %s9 = ssub.s32 1, %s7
  %s10 = scalar_select 0, %s9, %s7
  $region1: #{tpu_custom_call.1} parent=0
    #allocation5 [shape = 'u8[65536]{0}', space=vmem, size = 0x10000, scoped, tag = 'input window, operand 0, single buffered']
    #allocation6 [shape = 's32[2]{0}', space=sflag, size = 0x8, scoped, tag = 'scoped memory for tpu_custom_call.1']
    #allocation7 [shape = 's32[2]{0}', space=sflag, size = 0x8, scoped, tag = 'scoped memory for tpu_custom_call.1']
    #allocation8 [shape = 'u8[32768]{0}', space=vmem, size = 0x8000, scoped, tag = 'input window, operand 1, single buffered']
    #allocation9 [shape = 's32[1]{0}', space=sflag, size = 0x4, scoped, tag = 'scoped memory for tpu_custom_call.1']
    #allocation10 [shape = 'u8[65536]{0}', space=vmem, size = 0x10000, scoped, tag = 'input window, operand 5']
    #allocation11 [shape = 'u8[131072]{0}', space=vmem, size = 0x20000, scoped, tag = 'output window, operand 0']
    %11 = vsyncpa [#allocation6], 0
    %12 = vsyncpa [#allocation9], 0
    %13 = vsyncpa [#allocation7], 0
    %s14 = scalar_lea.sflag [#allocation7], 1
    %15 = vsyncpa %s14, 0
    loop: start=0, step=1, limit=4
    $region2: #{tpu_custom_call.1} parent=1 // loop_pre_header
      _
    $region3: #{tpu_custom_call.1} parent=1 // loop_header
      %s17 = sphi 0, %s21
      %p18 = scmp.ge.s32.totalorder %s17, 4
      %s25 = sphi 0, %s25
      %s27 = sphi 0, %s25
      %s28 = sphi 0, %s27
      %s42 = sphi 0, %s28
      %s46 = sphi 0, %s46
      %s48 = sphi 0, %s46
      %s49 = sphi 0, %s48
      %s63 = sphi 0, %s49
      %s67 = sphi 0, %s67
      %s69 = sphi 0, %s67
      %s70 = sphi 0, %s69
      %s84 = sphi 0, %s70
      %s88 = sphi 0, %s88
      %s90 = sphi 0, %s88
      %s91 = sphi 0, %s90
      %s105 = sphi 0, %s91
      %s109 = sphi 0, %s109
      %s111 = sphi 0, %s109
      %s112 = sphi 0, %s111
      %s126 = sphi 0, %s112
      %s132 = sphi 0, %s134
      %s135 = sphi 0, %s132
      %s136 = sphi 0, %s135
      %s152 = sphi 0, %s136
      %s158 = sphi 0, %s160
      %s161 = sphi 0, %s158
      %s162 = sphi 0, %s161
      %s178 = sphi 0, %s162
    $region4: #{tpu_custom_call.1} parent=1 // loop_header_branch
      %20 = sbr.rel (%p18) target = $region8
    $region5: #{tpu_custom_call.1} parent=1 // loop_body
      %s22 = ssub.s32 %s17, 1
      %s23 = ssub.s32 %s17, 2
      %s24 = sadd.s32 %s17, 1
      %s26 = sadd.s32 %s25, 1
      %p29 = scmp.eq.s32.totalorder %s17, 1
      %p30 = scmp.ne.s32.totalorder %s25, %s27
      %p31 = scmp.eq.s32.totalorder %s17, 0
      %p32 = por %p30, %p31
      %p33 = scmp.ne.s32.totalorder %s25, %s27
      %p34 = scmp.eq.s32.totalorder %s22, 1
      %p35 = por %p33, %p34
      %p36 = scmp.ne.s32.totalorder %s27, %s28
      %p37 = scmp.eq.s32.totalorder %s22, 0
      %p38 = por %p36, %p37
      %p39 = scmp.ne.s32.totalorder %s27, %s28
      %p40 = scmp.eq.s32.totalorder %s23, 1
      %p41 = por %p39, %p40
      %p43 = scmp.ne.s32.totalorder %s28, %s42
      %p44 = scmp.eq.s32.totalorder %s23, 0
      %p45 = por %p43, %p44
      %s47 = sadd.s32 %s46, 1
      %p50 = scmp.eq.s32.totalorder %s17, 1
      %p51 = scmp.ne.s32.totalorder %s46, %s48
      %p52 = scmp.eq.s32.totalorder %s17, 0
      %p53 = por %p51, %p52
      %p54 = scmp.ne.s32.totalorder %s46, %s48
      %p55 = scmp.eq.s32.totalorder %s22, 1
      %p56 = por %p54, %p55
      %p57 = scmp.ne.s32.totalorder %s48, %s49
      %p58 = scmp.eq.s32.totalorder %s22, 0
      %p59 = por %p57, %p58
      %p60 = scmp.ne.s32.totalorder %s48, %s49
      %p61 = scmp.eq.s32.totalorder %s23, 1
      %p62 = por %p60, %p61
      %p64 = scmp.ne.s32.totalorder %s49, %s63
      %p65 = scmp.eq.s32.totalorder %s23, 0
      %p66 = por %p64, %p65
      %s68 = sadd.s32 %s67, 1
      %p71 = scmp.eq.s32.totalorder %s17, 1
      %p72 = scmp.ne.s32.totalorder %s67, %s69
      %p73 = scmp.eq.s32.totalorder %s17, 0
      %p74 = por %p72, %p73
      %p75 = scmp.ne.s32.totalorder %s67, %s69
      %p76 = scmp.eq.s32.totalorder %s22, 1
      %p77 = por %p75, %p76
      %p78 = scmp.ne.s32.totalorder %s69, %s70
      %p79 = scmp.eq.s32.totalorder %s22, 0
      %p80 = por %p78, %p79
      %p81 = scmp.ne.s32.totalorder %s69, %s70
      %p82 = scmp.eq.s32.totalorder %s23, 1
      %p83 = por %p81, %p82
      %p85 = scmp.ne.s32.totalorder %s70, %s84
      %p86 = scmp.eq.s32.totalorder %s23, 0
      %p87 = por %p85, %p86
      %s89 = sadd.s32 %s88, 1
      %p92 = scmp.eq.s32.totalorder %s17, 1
      %p93 = scmp.ne.s32.totalorder %s88, %s90
      %p94 = scmp.eq.s32.totalorder %s17, 0
      %p95 = por %p93, %p94
      %p96 = scmp.ne.s32.totalorder %s88, %s90
      %p97 = scmp.eq.s32.totalorder %s22, 1
      %p98 = por %p96, %p97
      %p99 = scmp.ne.s32.totalorder %s90, %s91
      %p100 = scmp.eq.s32.totalorder %s22, 0
      %p101 = por %p99, %p100
      %p102 = scmp.ne.s32.totalorder %s90, %s91
      %p103 = scmp.eq.s32.totalorder %s23, 1
      %p104 = por %p102, %p103
      %p106 = scmp.ne.s32.totalorder %s91, %s105
      %p107 = scmp.eq.s32.totalorder %s23, 0
      %p108 = por %p106, %p107
      %s110 = sadd.s32 %s109, 1
      %p113 = scmp.eq.s32.totalorder %s17, 1
      %p114 = scmp.ne.s32.totalorder %s109, %s111
      %p115 = scmp.eq.s32.totalorder %s17, 0
      %p116 = por %p114, %p115
      %p117 = scmp.ne.s32.totalorder %s109, %s111
      %p118 = scmp.eq.s32.totalorder %s22, 1
      %p119 = por %p117, %p118
      %p120 = scmp.ne.s32.totalorder %s111, %s112
      %p121 = scmp.eq.s32.totalorder %s22, 0
      %p122 = por %p120, %p121
      %p123 = scmp.ne.s32.totalorder %s111, %s112
      %p124 = scmp.eq.s32.totalorder %s23, 1
      %p125 = por %p123, %p124
      %p127 = scmp.ne.s32.totalorder %s112, %s126
      %p128 = scmp.eq.s32.totalorder %s23, 0
      %p129 = por %p127, %p128
      %s130 = ssub.s32 %s17, %s24
      %p131 = scmp.eq.s32.totalorder %s130, 0
      %s133 = sadd.s32 %s132, 1
      %s134 = scalar_select %p131, %s132, %s133
      %p137 = pneg %p131
      %p138 = scmp.eq.s32.totalorder %s17, 1
      %p139 = por %p137, %p138
      %p140 = scmp.ne.s32.totalorder %s132, %s135
      %p141 = scmp.eq.s32.totalorder %s17, 0
      %p142 = por %p140, %p141
      %p143 = scmp.ne.s32.totalorder %s132, %s135
      %p144 = scmp.eq.s32.totalorder %s22, 1
      %p145 = por %p143, %p144
      %p146 = scmp.ne.s32.totalorder %s135, %s136
      %p147 = scmp.eq.s32.totalorder %s22, 0
      %p148 = por %p146, %p147
      %p149 = scmp.ne.s32.totalorder %s135, %s136
      %p150 = scmp.eq.s32.totalorder %s23, 1
      %p151 = por %p149, %p150
      %p153 = scmp.ne.s32.totalorder %s136, %s152
      %p154 = scmp.eq.s32.totalorder %s23, 0
      %p155 = por %p153, %p154
      %s156 = ssub.s32 %s17, %s24
      %p157 = scmp.eq.s32.totalorder %s156, 0
      %s159 = sadd.s32 %s158, 1
      %s160 = scalar_select %p157, %s158, %s159
      %p163 = pneg %p157
      %p164 = scmp.eq.s32.totalorder %s17, 1
      %p165 = por %p163, %p164
      %p166 = scmp.ne.s32.totalorder %s158, %s161
      %p167 = scmp.eq.s32.totalorder %s17, 0
      %p168 = por %p166, %p167
      %p169 = scmp.ne.s32.totalorder %s158, %s161
      %p170 = scmp.eq.s32.totalorder %s22, 1
      %p171 = por %p169, %p170
      %p172 = scmp.ne.s32.totalorder %s161, %s162
      %p173 = scmp.eq.s32.totalorder %s22, 0
      %p174 = por %p172, %p173
      %p175 = scmp.ne.s32.totalorder %s161, %s162
      %p176 = scmp.eq.s32.totalorder %s23, 1
      %p177 = por %p175, %p176
      %p179 = scmp.ne.s32.totalorder %s162, %s178
      %p180 = scmp.eq.s32.totalorder %s23, 0
      %p181 = por %p179, %p180
      %p182 = scmp.le.s32.totalorder 1, %s17
      %p183 = scmp.lt.s32.totalorder %s17, 3
      %p184 = pnand %p182, %p183
      %p185 = pneg %p184
      // Predicated region
      $region9: #{tpu_custom_call.1} parent=5 // pred_check
        _
      $region10: #{tpu_custom_call.1} parent=5 // pred_check_branch
        %187 = sbr.rel (%p184) target = $region12
      $region11: #{tpu_custom_call.1} parent=5 // pred_region
        %s188 = ssub.s32 %s17, 1
        // Predicated region
        $region13: #{tpu_custom_call.1} parent=11 // pred_check
          %p189 = pneg %p38
        $region14: #{tpu_custom_call.1} parent=11 // pred_check_branch
          %191 = sbr.rel (%p189) target = $region16
        $region15: #{tpu_custom_call.1} parent=11 // pred_region
          %193 = vsyncadd [#allocation6], 0
          %s194 = sshll.u32 %s0, 4
          %s195 = int_to_ptr.hbm [resolvable:$true] %s194
          %s196 = sshll.u32 [#allocation5], 4
          %s197 = int_to_ptr.vmem [resolvable:$true] %s196
          %202 = dma.hbm_to_vmem [thread:$0]  %s195, 2048, %s197, [#allocation6], 64, 64, 4
        $region16: #{tpu_custom_call.1} parent=11 // pred_fallthru
          _
        // Predicated region
        $region17: #{tpu_custom_call.1} parent=11 // pred_check
          %p203 = pneg %p59
        $region18: #{tpu_custom_call.1} parent=11 // pred_check_branch
          %205 = sbr.rel (%p203) target = $region20
        $region19: #{tpu_custom_call.1} parent=11 // pred_region
          %207 = vsyncadd [#allocation9], 0
          %s208 = sshll.u32 %s1, 4
          %s209 = int_to_ptr.hbm [resolvable:$true] %s208
          %s210 = sshll.u32 [#allocation8], 4
          %s211 = int_to_ptr.vmem [resolvable:$true] %s210
          %216 = dma.hbm_to_vmem [thread:$0]  %s209, 1024, %s211, [#allocation9], 64, 64, 4
        $region20: #{tpu_custom_call.1} parent=11 // pred_fallthru
          _
        // Predicated region
        $region21: #{tpu_custom_call.1} parent=11 // pred_check
          %p217 = pneg %p80
        $region22: #{tpu_custom_call.1} parent=11 // pred_check_branch
          %219 = sbr.rel (%p217) target = $region24
        $region23: #{tpu_custom_call.1} parent=11 // pred_region
          _
        $region24: #{tpu_custom_call.1} parent=11 // pred_fallthru
          _
        // Predicated region
        $region25: #{tpu_custom_call.1} parent=11 // pred_check
          %p220 = pneg %p101
        $region26: #{tpu_custom_call.1} parent=11 // pred_check_branch
          %222 = sbr.rel (%p220) target = $region28
        $region27: #{tpu_custom_call.1} parent=11 // pred_region
          _
        $region28: #{tpu_custom_call.1} parent=11 // pred_fallthru
          _
        // Predicated region
        $region29: #{tpu_custom_call.1} parent=11 // pred_check
          %p223 = pneg %p122
        $region30: #{tpu_custom_call.1} parent=11 // pred_check_branch
          %225 = sbr.rel (%p223) target = $region32
        $region31: #{tpu_custom_call.1} parent=11 // pred_region
          _
        $region32: #{tpu_custom_call.1} parent=11 // pred_fallthru
          _
      $region12: #{tpu_custom_call.1} parent=5 // pred_fallthru
        _
      %p226 = scmp.lt.s32.totalorder %s17, 2
      // Predicated region
      $region33: #{tpu_custom_call.1} parent=5 // pred_check
        %p227 = pneg %p226
      $region34: #{tpu_custom_call.1} parent=5 // pred_check_branch
        %229 = sbr.rel (%p227) target = $region36
      $region35: #{tpu_custom_call.1} parent=5 // pred_region
        // Predicated region
        $region37: #{tpu_custom_call.1} parent=35 // pred_check
          %p230 = pneg %p142
        $region38: #{tpu_custom_call.1} parent=35 // pred_check_branch
          %232 = sbr.rel (%p230) target = $region40
        $region39: #{tpu_custom_call.1} parent=35 // pred_region
          %s233 = sand.u32 %s17, 1
          %s234 = scalar_lea.sflag [#allocation6], %s233
          %s235 = sand.u32 %s132, 1
          %s236 = smul.addr %s235, 64
          %s237 = scalar_lea.vmem [#allocation10], %s236
          %s238 = smul.u32 4, %s17
          %240 = vsyncadd %s234, 0
          %s241 = smul.addr %s238, 2
          %s242 = smul.addr %s241, 8
          %s243 = scalar_lea.hbm %s5, %s242
          %s244 = sshll.u32 %s243, 4
          %s245 = int_to_ptr.hbm [resolvable:$true] %s244
          %s246 = sshll.u32 %s237, 4
          %s247 = int_to_ptr.vmem [resolvable:$true] %s246
          %252 = dma.hbm_to_vmem [thread:$0]  %s245, 1024, %s247, %s234, 256, 256, 16
        $region40: #{tpu_custom_call.1} parent=35 // pred_fallthru
          _
      $region36: #{tpu_custom_call.1} parent=5 // pred_fallthru
        _
      %p253 = scmp.le.s32.totalorder 1, %s17
      %p254 = scmp.lt.s32.totalorder %s17, 3
      %p255 = pnand %p253, %p254
      %p256 = pneg %p255
      // Predicated region
      $region41: #{tpu_custom_call.1} parent=5 // pred_check
        _
      $region42: #{tpu_custom_call.1} parent=5 // pred_check_branch
        %258 = sbr.rel (%p255) target = $region44
      $region43: #{tpu_custom_call.1} parent=5 // pred_region
        %s259 = ssub.s32 %s17, 1
        // Predicated region
        $region45: #{tpu_custom_call.1} parent=43 // pred_check
          %p260 = pneg %p38
        $region46: #{tpu_custom_call.1} parent=43 // pred_check_branch
          %262 = sbr.rel (%p260) target = $region48
        $region47: #{tpu_custom_call.1} parent=43 // pred_region
          %264 = dma.done [#allocation6], 2048
        $region48: #{tpu_custom_call.1} parent=43 // pred_fallthru
          _
        // Predicated region
        $region49: #{tpu_custom_call.1} parent=43 // pred_check
          %p265 = pneg %p59
        $region50: #{tpu_custom_call.1} parent=43 // pred_check_branch
          %267 = sbr.rel (%p265) target = $region52
        $region51: #{tpu_custom_call.1} parent=43 // pred_region
          %269 = dma.done [#allocation9], 1024
        $region52: #{tpu_custom_call.1} parent=43 // pred_fallthru
          _
        %s270 = sand.u32 %s22, 1
        %s271 = scalar_lea.sflag [#allocation6], %s270
        %s272 = sand.u32 %s135, 1
        %s273 = smul.addr %s272, 64
        %s274 = scalar_lea.vmem [#allocation10], %s273
        // Predicated region
        $region53: #{tpu_custom_call.1} parent=43 // pred_check
          %p275 = pneg %p148
        $region54: #{tpu_custom_call.1} parent=43 // pred_check_branch
          %277 = sbr.rel (%p275) target = $region56
        $region55: #{tpu_custom_call.1} parent=43 // pred_region
          %279 = dma.done %s271, 1024
        $region56: #{tpu_custom_call.1} parent=43 // pred_fallthru
          _
        %p280 = pneg %p38
        %p281 = pneg %p35
        %p282 = pneg %p59
        %p283 = pneg %p56
        %p284 = pneg %p80
        %p285 = pneg %p77
        %p286 = pneg %p101
        %p287 = pneg %p98
        %p288 = pneg %p122
        %p289 = pneg %p119
        %s290 = sand.u32 %s22, 1
        %s291 = scalar_lea.sflag [#allocation6], %s290
        %s292 = sand.u32 %s135, 1
        %s293 = smul.addr %s292, 64
        %s294 = scalar_lea.vmem [#allocation10], %s293
        %p295 = pneg %p148
        %p296 = pneg %p145
        %p297 = pneg %p174
        %p298 = pneg %p171
        %s299 = sand.u32 %s161, 1
        %s300 = scalar_lea.sflag [#allocation7], %s299
        %s301 = sand.u32 %s161, 1
        %s302 = smul.addr %s301, 128
        %s303 = scalar_lea.vmem [#allocation11], %s302
        %s304 = smul.u32 4, %s22
        %s305 = smul.u32 16, %s22
        %p306 = scmp.eq.s32.totalorder %s22, 0
        // Predicated region
        $region57: #{tpu_custom_call.1} parent=43 // pred_check
          %p307 = pneg %p306
        $region58: #{tpu_custom_call.1} parent=43 // pred_check_branch
          %309 = sbr.rel (%p307) target = $region60
        $region59: #{tpu_custom_call.1} parent=43 // pred_region
          %v310 = vld [vmem:[#allocation5] sm:$0xf]
          %v311 = vld [vmem:[#allocation5 + $0x4] sm:$0xf]
          %v312 = vld [vmem:[#allocation5 + $0x8] sm:$0xf]
          %v313 = vld [vmem:[#allocation5 + $0xc] sm:$0xf]
          %v314 = vld [vmem:[#allocation5 + $0x10] sm:$0xf]
          %v315 = vld [vmem:[#allocation5 + $0x14] sm:$0xf]
          %v316 = vld [vmem:[#allocation5 + $0x18] sm:$0xf]
          %v317 = vld [vmem:[#allocation5 + $0x1c] sm:$0xf]
          %v318 = vld [vmem:[#allocation5 + $0x20] sm:$0xf]
          %v319 = vld [vmem:[#allocation5 + $0x24] sm:$0xf]
          %v320 = vld [vmem:[#allocation5 + $0x28] sm:$0xf]
          %v321 = vld [vmem:[#allocation5 + $0x2c] sm:$0xf]
          %v322 = vld [vmem:[#allocation5 + $0x30] sm:$0xf]
          %v323 = vld [vmem:[#allocation5 + $0x34] sm:$0xf]
          %v324 = vld [vmem:[#allocation5 + $0x38] sm:$0xf]
          %v325 = vld [vmem:[#allocation5 + $0x3c] sm:$0xf]
          %v326 = vld [vmem:[#allocation5 + $0x40] sm:$0xf]
          %v327 = vld [vmem:[#allocation5 + $0x44] sm:$0xf]
          %v328 = vld [vmem:[#allocation5 + $0x48] sm:$0xf]
          %v329 = vld [vmem:[#allocation5 + $0x4c] sm:$0xf]
          %v330 = vld [vmem:[#allocation5 + $0x50] sm:$0xf]
          %v331 = vld [vmem:[#allocation5 + $0x54] sm:$0xf]
          %v332 = vld [vmem:[#allocation5 + $0x58] sm:$0xf]
          %v333 = vld [vmem:[#allocation5 + $0x5c] sm:$0xf]
          %v334 = vld [vmem:[#allocation5 + $0x60] sm:$0xf]
          %v335 = vld [vmem:[#allocation5 + $0x64] sm:$0xf]
          %v336 = vld [vmem:[#allocation5 + $0x68] sm:$0xf]
          %v337 = vld [vmem:[#allocation5 + $0x6c] sm:$0xf]
          %v338 = vld [vmem:[#allocation5 + $0x70] sm:$0xf]
          %v339 = vld [vmem:[#allocation5 + $0x74] sm:$0xf]
          %v340 = vld [vmem:[#allocation5 + $0x78] sm:$0xf]
          %v341 = vld [vmem:[#allocation5 + $0x7c] sm:$0xf]
          %v342 = vld [vmem:[#allocation8] sm:$0xf]
          %v343 = vld [vmem:[#allocation8 + $0x4] sm:$0xf]
          %v344 = vld [vmem:[#allocation8 + $0x8] sm:$0xf]
          %v345 = vld [vmem:[#allocation8 + $0xc] sm:$0xf]
          %v346 = vld [vmem:[#allocation8 + $0x10] sm:$0xf]
          %v347 = vld [vmem:[#allocation8 + $0x14] sm:$0xf]
          %v348 = vld [vmem:[#allocation8 + $0x18] sm:$0xf]
          %v349 = vld [vmem:[#allocation8 + $0x1c] sm:$0xf]
          %v350 = vld [vmem:[#allocation8 + $0x20] sm:$0xf]
          %v351 = vld [vmem:[#allocation8 + $0x24] sm:$0xf]
          %v352 = vld [vmem:[#allocation8 + $0x28] sm:$0xf]
          %v353 = vld [vmem:[#allocation8 + $0x2c] sm:$0xf]
          %v354 = vld [vmem:[#allocation8 + $0x30] sm:$0xf]
          %v355 = vld [vmem:[#allocation8 + $0x34] sm:$0xf]
          %v356 = vld [vmem:[#allocation8 + $0x38] sm:$0xf]
          %v357 = vld [vmem:[#allocation8 + $0x3c] sm:$0xf]
          %v390 = vunpack.c.l.b16 %v310
          %v391 = vunpack.c.l.b16 %v311
          %v392 = vunpack.c.l.b16 %v312
          %v393 = vunpack.c.l.b16 %v313
          %v394 = vunpack.c.l.b16 %v314
          %v395 = vunpack.c.l.b16 %v315
          %v396 = vunpack.c.l.b16 %v316
          %v397 = vunpack.c.l.b16 %v317
          %v398 = vunpack.c.l.b16 %v318
          %v399 = vunpack.c.l.b16 %v319
          %v400 = vunpack.c.l.b16 %v320
          %v401 = vunpack.c.l.b16 %v321
          %v402 = vunpack.c.l.b16 %v322
          %v403 = vunpack.c.l.b16 %v323
          %v404 = vunpack.c.l.b16 %v324
          %v405 = vunpack.c.l.b16 %v325
          %v406 = vunpack.c.l.b16 %v326
          %v407 = vunpack.c.l.b16 %v327
          %v408 = vunpack.c.l.b16 %v328
          %v409 = vunpack.c.l.b16 %v329
          %v410 = vunpack.c.l.b16 %v330
          %v411 = vunpack.c.l.b16 %v331
          %v412 = vunpack.c.l.b16 %v332
          %v413 = vunpack.c.l.b16 %v333
          %v414 = vunpack.c.l.b16 %v334
          %v415 = vunpack.c.l.b16 %v335
          %v416 = vunpack.c.l.b16 %v336
          %v417 = vunpack.c.l.b16 %v337
          %v418 = vunpack.c.l.b16 %v338
          %v419 = vunpack.c.l.b16 %v339
          %v420 = vunpack.c.l.b16 %v340
          %v421 = vunpack.c.l.b16 %v341
          %v422 = vpack.c.b16 %v391, %v390
          %v423 = vpack.c.b16 %v393, %v392
          %v424 = vpack.c.b16 %v395, %v394
          %v425 = vpack.c.b16 %v397, %v396
          %v426 = vpack.c.b16 %v399, %v398
          %v427 = vpack.c.b16 %v401, %v400
          %v428 = vpack.c.b16 %v403, %v402
          %v429 = vpack.c.b16 %v405, %v404
          %v430 = vpack.c.b16 %v407, %v406
          %v431 = vpack.c.b16 %v409, %v408
          %v432 = vpack.c.b16 %v411, %v410
          %v433 = vpack.c.b16 %v413, %v412
          %v434 = vpack.c.b16 %v415, %v414
          %v435 = vpack.c.b16 %v417, %v416
          %v436 = vpack.c.b16 %v419, %v418
          %v437 = vpack.c.b16 %v421, %v420
          %v470 = vunpack.c.l.b16 %v342
          %v471 = vunpack.c.l.b16 %v343
          %v472 = vunpack.c.l.b16 %v344
          %v473 = vunpack.c.l.b16 %v345
          %v474 = vunpack.c.l.b16 %v346
          %v475 = vunpack.c.l.b16 %v347
          %v476 = vunpack.c.l.b16 %v348
          %v477 = vunpack.c.l.b16 %v349
          %v478 = vunpack.c.l.b16 %v350
          %v479 = vunpack.c.l.b16 %v351
          %v480 = vunpack.c.l.b16 %v352
          %v481 = vunpack.c.l.b16 %v353
          %v482 = vunpack.c.l.b16 %v354
          %v483 = vunpack.c.l.b16 %v355
          %v484 = vunpack.c.l.b16 %v356
          %v485 = vunpack.c.l.b16 %v357
          %v486 = vpack.c.b16 %v471, %v470
          %v487 = vpack.c.b16 %v473, %v472
          %v488 = vpack.c.b16 %v475, %v474
          %v489 = vpack.c.b16 %v477, %v476
          %v490 = vpack.c.b16 %v479, %v478
          %v491 = vpack.c.b16 %v481, %v480
          %v492 = vpack.c.b16 %v483, %v482
          %v493 = vpack.c.b16 %v485, %v484
          %502 = vmatpush.bf16.msra.mxu0 %v493
          %503 = vmatpush.bf16.msra.mxu0 %v492
          %504 = vmatpush.bf16.msra.mxu0 %v491
          %505 = vmatpush.bf16.msra.mxu0 %v490
          %506 = vmatpush.bf16.msra.mxu0 %v489
          %507 = vmatpush.bf16.msra.mxu0 %v488
          %508 = vmatpush.bf16.msra.mxu0 %v487
          %509 = vmatpush.bf16.msra.mxu0 %v486
          %510 = vmatmul.bf16.gmra.mxu0 %v422
          %v511 = vpop.f32.mrf.mxu0
          %v512 = vadd.f32 0.0, %v511
          %v513 = vpop.f32.mrf.mxu0
          %v514 = vadd.f32 0.0, %v513
          %515 = vmatmul.bf16.gmra.mxu0 %v423
          %v516 = vpop.f32.mrf.mxu0
          %v517 = vadd.f32 0.0, %v516
          %v518 = vpop.f32.mrf.mxu0
          %v519 = vadd.f32 0.0, %v518
          %520 = vmatmul.bf16.gmra.mxu0 %v424
          %v521 = vpop.f32.mrf.mxu0
          %v522 = vadd.f32 0.0, %v521
          %v523 = vpop.f32.mrf.mxu0
          %v524 = vadd.f32 0.0, %v523
          %525 = vmatmul.bf16.gmra.mxu0 %v425
          %v526 = vpop.f32.mrf.mxu0
          %v527 = vadd.f32 0.0, %v526
          %v528 = vpop.f32.mrf.mxu0
          %v529 = vadd.f32 0.0, %v528
          %530 = vmatmul.bf16.gmra.mxu0 %v426
          %v531 = vpop.f32.mrf.mxu0
          %v532 = vadd.f32 0.0, %v531
          %v533 = vpop.f32.mrf.mxu0
          %v534 = vadd.f32 0.0, %v533
          %535 = vmatmul.bf16.gmra.mxu0 %v427
          %v536 = vpop.f32.mrf.mxu0
          %v537 = vadd.f32 0.0, %v536
          %v538 = vpop.f32.mrf.mxu0
          %v539 = vadd.f32 0.0, %v538
          %540 = vmatmul.bf16.gmra.mxu0 %v428
          %v541 = vpop.f32.mrf.mxu0
          %v542 = vadd.f32 0.0, %v541
          %v543 = vpop.f32.mrf.mxu0
          %v544 = vadd.f32 0.0, %v543
          %545 = vmatmul.bf16.gmra.mxu0 %v429
          %v546 = vpop.f32.mrf.mxu0
          %v547 = vadd.f32 0.0, %v546
          %v548 = vpop.f32.mrf.mxu0
          %v549 = vadd.f32 0.0, %v548
          %550 = vmatmul.bf16.gmra.mxu0 %v430
          %v551 = vpop.f32.mrf.mxu0
          %v552 = vadd.f32 0.0, %v551
          %v553 = vpop.f32.mrf.mxu0
          %v554 = vadd.f32 0.0, %v553
          %555 = vmatmul.bf16.gmra.mxu0 %v431
          %v556 = vpop.f32.mrf.mxu0
          %v557 = vadd.f32 0.0, %v556
          %v558 = vpop.f32.mrf.mxu0
          %v559 = vadd.f32 0.0, %v558
          %560 = vmatmul.bf16.gmra.mxu0 %v432
          %v561 = vpop.f32.mrf.mxu0
          %v562 = vadd.f32 0.0, %v561
          %v563 = vpop.f32.mrf.mxu0
          %v564 = vadd.f32 0.0, %v563
          %565 = vmatmul.bf16.gmra.mxu0 %v433
          %v566 = vpop.f32.mrf.mxu0
          %v567 = vadd.f32 0.0, %v566
          %v568 = vpop.f32.mrf.mxu0
          %v569 = vadd.f32 0.0, %v568
          %570 = vmatmul.bf16.gmra.mxu0 %v434
          %v571 = vpop.f32.mrf.mxu0
          %v572 = vadd.f32 0.0, %v571
          %v573 = vpop.f32.mrf.mxu0
          %v574 = vadd.f32 0.0, %v573
          %575 = vmatmul.bf16.gmra.mxu0 %v435
          %v576 = vpop.f32.mrf.mxu0
          %v577 = vadd.f32 0.0, %v576
          %v578 = vpop.f32.mrf.mxu0
          %v579 = vadd.f32 0.0, %v578
          %580 = vmatmul.bf16.gmra.mxu0 %v436
          %v581 = vpop.f32.mrf.mxu0
          %v582 = vadd.f32 0.0, %v581
          %v583 = vpop.f32.mrf.mxu0
          %v584 = vadd.f32 0.0, %v583
          %585 = vmatmul.bf16.gmra.mxu0 %v437
          %v586 = vpop.f32.mrf.mxu0
          %v587 = vadd.f32 0.0, %v586
          %v588 = vpop.f32.mrf.mxu0
          %v589 = vadd.f32 0.0, %v588
          %590 = vdwg.mxu0
          %v591 = vpack.c.bf16 %v512, %v512
          %v592 = vpack.c.bf16 %v514, %v514
          %v593 = vpack.c.bf16 %v517, %v517
          %v594 = vpack.c.bf16 %v519, %v519
          %v595 = vpack.c.bf16 %v522, %v522
          %v596 = vpack.c.bf16 %v524, %v524
          %v597 = vpack.c.bf16 %v527, %v527
          %v598 = vpack.c.bf16 %v529, %v529
          %v599 = vpack.c.bf16 %v532, %v532
          %v600 = vpack.c.bf16 %v534, %v534
          %v601 = vpack.c.bf16 %v537, %v537
          %v602 = vpack.c.bf16 %v539, %v539
          %v603 = vpack.c.bf16 %v542, %v542
          %v604 = vpack.c.bf16 %v544, %v544
          %v605 = vpack.c.bf16 %v547, %v547
          %v606 = vpack.c.bf16 %v549, %v549
          %v607 = vpack.c.bf16 %v552, %v552
          %v608 = vpack.c.bf16 %v554, %v554
          %v609 = vpack.c.bf16 %v557, %v557
          %v610 = vpack.c.bf16 %v559, %v559
          %v611 = vpack.c.bf16 %v562, %v562
          %v612 = vpack.c.bf16 %v564, %v564
          %v613 = vpack.c.bf16 %v567, %v567
          %v614 = vpack.c.bf16 %v569, %v569
          %v615 = vpack.c.bf16 %v572, %v572
          %v616 = vpack.c.bf16 %v574, %v574
          %v617 = vpack.c.bf16 %v577, %v577
          %v618 = vpack.c.bf16 %v579, %v579
          %v619 = vpack.c.bf16 %v582, %v582
          %v620 = vpack.c.bf16 %v584, %v584
          %v621 = vpack.c.bf16 %v587, %v587
          %v622 = vpack.c.bf16 %v589, %v589
          %623 = vst [vmem:[#allocation2] sm:$0xf] %v591
          %624 = vst [vmem:[#allocation2 + $0x4] sm:$0xf] %v592
          %625 = vst [vmem:[#allocation2 + $0x8] sm:$0xf] %v593
          %626 = vst [vmem:[#allocation2 + $0xc] sm:$0xf] %v594
          %627 = vst [vmem:[#allocation2 + $0x10] sm:$0xf] %v595
          %628 = vst [vmem:[#allocation2 + $0x14] sm:$0xf] %v596
          %629 = vst [vmem:[#allocation2 + $0x18] sm:$0xf] %v597
          %630 = vst [vmem:[#allocation2 + $0x1c] sm:$0xf] %v598
          %631 = vst [vmem:[#allocation2 + $0x20] sm:$0xf] %v599
          %632 = vst [vmem:[#allocation2 + $0x24] sm:$0xf] %v600
          %633 = vst [vmem:[#allocation2 + $0x28] sm:$0xf] %v601
          %634 = vst [vmem:[#allocation2 + $0x2c] sm:$0xf] %v602
          %635 = vst [vmem:[#allocation2 + $0x30] sm:$0xf] %v603
          %636 = vst [vmem:[#allocation2 + $0x34] sm:$0xf] %v604
          %637 = vst [vmem:[#allocation2 + $0x38] sm:$0xf] %v605
          %638 = vst [vmem:[#allocation2 + $0x3c] sm:$0xf] %v606
          %639 = vst [vmem:[#allocation2 + $0x40] sm:$0xf] %v607
          %640 = vst [vmem:[#allocation2 + $0x44] sm:$0xf] %v608
          %641 = vst [vmem:[#allocation2 + $0x48] sm:$0xf] %v609
          %642 = vst [vmem:[#allocation2 + $0x4c] sm:$0xf] %v610
          %643 = vst [vmem:[#allocation2 + $0x50] sm:$0xf] %v611
          %644 = vst [vmem:[#allocation2 + $0x54] sm:$0xf] %v612
          %645 = vst [vmem:[#allocation2 + $0x58] sm:$0xf] %v613
          %646 = vst [vmem:[#allocation2 + $0x5c] sm:$0xf] %v614
          %647 = vst [vmem:[#allocation2 + $0x60] sm:$0xf] %v615
          %648 = vst [vmem:[#allocation2 + $0x64] sm:$0xf] %v616
          %649 = vst [vmem:[#allocation2 + $0x68] sm:$0xf] %v617
          %650 = vst [vmem:[#allocation2 + $0x6c] sm:$0xf] %v618
          %651 = vst [vmem:[#allocation2 + $0x70] sm:$0xf] %v619
          %652 = vst [vmem:[#allocation2 + $0x74] sm:$0xf] %v620
          %653 = vst [vmem:[#allocation2 + $0x78] sm:$0xf] %v621
          %654 = vst [vmem:[#allocation2 + $0x7c] sm:$0xf] %v622
          %v655 = vld [vmem:[%s2] sm:$0x1]
          %656 = vmatpush.bf16.xpose.msra.mxu0 %v429
          %657 = vmatpush.bf16.xpose.msra.mxu0 %v428
          %658 = vmatpush.bf16.xpose.msra.mxu0 %v427
          %659 = vmatpush.bf16.xpose.msra.mxu0 %v426
          %660 = vmatpush.bf16.xpose.msra.mxu0 %v425
          %661 = vmatpush.bf16.xpose.msra.mxu0 %v424
          %662 = vmatpush.bf16.xpose.msra.mxu0 %v423
          %663 = vmatpush.bf16.xpose.msra.mxu0 %v422
          %664 = vmatmul.bf16.gmra.mxu0 %v655
          %v665 = vpop.f32.mrf.mxu0
          %v666 = vadd.f32 0.0, %v665
          %v667 = vpop.f32.mrf.mxu0
          %668 = vdwg.mxu0
          %669 = vmatpush.bf16.xpose.msra.mxu0 %v437
          %670 = vmatpush.bf16.xpose.msra.mxu0 %v436
          %671 = vmatpush.bf16.xpose.msra.mxu0 %v435
          %672 = vmatpush.bf16.xpose.msra.mxu0 %v434
          %673 = vmatpush.bf16.xpose.msra.mxu0 %v433
          %674 = vmatpush.bf16.xpose.msra.mxu0 %v432
          %675 = vmatpush.bf16.xpose.msra.mxu0 %v431
          %676 = vmatpush.bf16.xpose.msra.mxu0 %v430
          %677 = vmatmul.bf16.gmra.mxu0 %v655
          %v678 = vpop.f32.mrf.mxu0
          %v679 = vadd.f32 0.0, %v678
          %v680 = vpop.f32.mrf.mxu0
          %681 = vdwg.mxu0
          %v684 = vrot.slane %v679, 7
          %vm685 = vcmask 1040384
          %v686 = vsel %vm685, %v666, %v684
          %v688 = vlaneseq
          %vm689 = vcmp.ge.s32.totalorder %v688, 0
          %vm690 = vcmp.lt.s32.totalorder %v688, 256
          %vm691 = vmand %vm689, %vm690
          %692 = vst.msk [vmem:[#allocation3] sm:$0x3] %vm691, %v686
          %v693 = vunpack.c.l.bf16 %v310
          %v694 = vunpack.c.l.bf16 %v311
          %v695 = vunpack.c.l.bf16 %v312
          %v696 = vunpack.c.l.bf16 %v313
          %v697 = vunpack.c.l.bf16 %v314
          %v698 = vunpack.c.l.bf16 %v315
          %v699 = vunpack.c.l.bf16 %v316
          %v700 = vunpack.c.l.bf16 %v317
          %v701 = vunpack.c.l.bf16 %v318
          %v702 = vunpack.c.l.bf16 %v319
          %v703 = vunpack.c.l.bf16 %v320
          %v704 = vunpack.c.l.bf16 %v321
          %v705 = vunpack.c.l.bf16 %v322
          %v706 = vunpack.c.l.bf16 %v323
          %v707 = vunpack.c.l.bf16 %v324
          %v708 = vunpack.c.l.bf16 %v325
          %v709 = vunpack.c.l.bf16 %v326
          %v710 = vunpack.c.l.bf16 %v327
          %v711 = vunpack.c.l.bf16 %v328
          %v712 = vunpack.c.l.bf16 %v329
          %v713 = vunpack.c.l.bf16 %v330
          %v714 = vunpack.c.l.bf16 %v331
          %v715 = vunpack.c.l.bf16 %v332
          %v716 = vunpack.c.l.bf16 %v333
          %v717 = vunpack.c.l.bf16 %v334
          %v718 = vunpack.c.l.bf16 %v335
          %v719 = vunpack.c.l.bf16 %v336
          %v720 = vunpack.c.l.bf16 %v337
          %v721 = vunpack.c.l.bf16 %v338
          %v722 = vunpack.c.l.bf16 %v339
          %v723 = vunpack.c.l.bf16 %v340
          %v724 = vunpack.c.l.bf16 %v341
          %v725 = vld [vmem:[%s3] sm:$0x1]
          %v726 = vunpack.c.l.bf16 %v725
          %v727 = vperm.slane %v726, 0
          %v728 = vmul.f32 %v693, %v727
          %v729 = vmul.f32 %v694, %v727
          %v730 = vmul.f32 %v695, %v727
          %v731 = vmul.f32 %v696, %v727
          %v732 = vmul.f32 %v697, %v727
          %v733 = vmul.f32 %v698, %v727
          %v734 = vmul.f32 %v699, %v727
          %v735 = vmul.f32 %v700, %v727
          %v736 = vmul.f32 %v701, %v727
          %v737 = vmul.f32 %v702, %v727
          %v738 = vmul.f32 %v703, %v727
          %v739 = vmul.f32 %v704, %v727
          %v740 = vmul.f32 %v705, %v727
          %v741 = vmul.f32 %v706, %v727
          %v742 = vmul.f32 %v707, %v727
          %v743 = vmul.f32 %v708, %v727
          %v744 = vmul.f32 %v709, %v727
          %v745 = vmul.f32 %v710, %v727
          %v746 = vmul.f32 %v711, %v727
          %v747 = vmul.f32 %v712, %v727
          %v748 = vmul.f32 %v713, %v727
          %v749 = vmul.f32 %v714, %v727
          %v750 = vmul.f32 %v715, %v727
          %v751 = vmul.f32 %v716, %v727
          %v752 = vmul.f32 %v717, %v727
          %v753 = vmul.f32 %v718, %v727
          %v754 = vmul.f32 %v719, %v727
          %v755 = vmul.f32 %v720, %v727
          %v756 = vmul.f32 %v721, %v727
          %v757 = vmul.f32 %v722, %v727
          %v758 = vmul.f32 %v723, %v727
          %v759 = vmul.f32 %v724, %v727
          %760 = vadd.xlane.f32.xlu0 %v728
          %v761 = vpop.xlane.xlu0 %760
          %762 = vadd.xlane.f32.xlu0 %v729
          %v763 = vpop.xlane.xlu0 %762
          %764 = vadd.xlane.f32.xlu0 %v730
          %v765 = vpop.xlane.xlu0 %764
          %766 = vadd.xlane.f32.xlu0 %v731
          %v767 = vpop.xlane.xlu0 %766
          %768 = vadd.xlane.f32.xlu0 %v732
          %v769 = vpop.xlane.xlu0 %768
          %770 = vadd.xlane.f32.xlu0 %v733
          %v771 = vpop.xlane.xlu0 %770
          %772 = vadd.xlane.f32.xlu0 %v734
          %v773 = vpop.xlane.xlu0 %772
          %774 = vadd.xlane.f32.xlu0 %v735
          %v775 = vpop.xlane.xlu0 %774
          %776 = vadd.xlane.f32.xlu0 %v736
          %v777 = vpop.xlane.xlu0 %776
          %778 = vadd.xlane.f32.xlu0 %v737
          %v779 = vpop.xlane.xlu0 %778
          %780 = vadd.xlane.f32.xlu0 %v738
          %v781 = vpop.xlane.xlu0 %780
          %782 = vadd.xlane.f32.xlu0 %v739
          %v783 = vpop.xlane.xlu0 %782
          %784 = vadd.xlane.f32.xlu0 %v740
          %v785 = vpop.xlane.xlu0 %784
          %786 = vadd.xlane.f32.xlu0 %v741
          %v787 = vpop.xlane.xlu0 %786
          %788 = vadd.xlane.f32.xlu0 %v742
          %v789 = vpop.xlane.xlu0 %788
          %790 = vadd.xlane.f32.xlu0 %v743
          %v791 = vpop.xlane.xlu0 %790
          %792 = vadd.xlane.f32.xlu0 %v744
          %v793 = vpop.xlane.xlu0 %792
          %794 = vadd.xlane.f32.xlu0 %v745
          %v795 = vpop.xlane.xlu0 %794
          %796 = vadd.xlane.f32.xlu0 %v746
          %v797 = vpop.xlane.xlu0 %796
          %798 = vadd.xlane.f32.xlu0 %v747
          %v799 = vpop.xlane.xlu0 %798
          %800 = vadd.xlane.f32.xlu0 %v748
          %v801 = vpop.xlane.xlu0 %800
          %802 = vadd.xlane.f32.xlu0 %v749
          %v803 = vpop.xlane.xlu0 %802
          %804 = vadd.xlane.f32.xlu0 %v750
          %v805 = vpop.xlane.xlu0 %804
          %806 = vadd.xlane.f32.xlu0 %v751
          %v807 = vpop.xlane.xlu0 %806
          %808 = vadd.xlane.f32.xlu0 %v752
          %v809 = vpop.xlane.xlu0 %808
          %810 = vadd.xlane.f32.xlu0 %v753
          %v811 = vpop.xlane.xlu0 %810
          %812 = vadd.xlane.f32.xlu0 %v754
          %v813 = vpop.xlane.xlu0 %812
          %814 = vadd.xlane.f32.xlu0 %v755
          %v815 = vpop.xlane.xlu0 %814
          %816 = vadd.xlane.f32.xlu0 %v756
          %v817 = vpop.xlane.xlu0 %816
          %818 = vadd.xlane.f32.xlu0 %v757
          %v819 = vpop.xlane.xlu0 %818
          %820 = vadd.xlane.f32.xlu0 %v758
          %v821 = vpop.xlane.xlu0 %820
          %822 = vadd.xlane.f32.xlu0 %v759
          %v823 = vpop.xlane.xlu0 %822
          %vm824 = vcmask 7168
          %825 = vst.msk [vmem:[#allocation4] sm:$0xff] %vm824, %v761
          %826 = vst.msk [vmem:[#allocation4 + $0x8] sm:$0xff] %vm824, %v763
          %827 = vst.msk [vmem:[#allocation4 + $0x10] sm:$0xff] %vm824, %v765
          %828 = vst.msk [vmem:[#allocation4 + $0x18] sm:$0xff] %vm824, %v767
          %829 = vst.msk [vmem:[#allocation4 + $0x20] sm:$0xff] %vm824, %v769
          %830 = vst.msk [vmem:[#allocation4 + $0x28] sm:$0xff] %vm824, %v771
          %831 = vst.msk [vmem:[#allocation4 + $0x30] sm:$0xff] %vm824, %v773
          %832 = vst.msk [vmem:[#allocation4 + $0x38] sm:$0xff] %vm824, %v775
          %833 = vst.msk [vmem:[#allocation4 + $0x40] sm:$0xff] %vm824, %v777
          %834 = vst.msk [vmem:[#allocation4 + $0x48] sm:$0xff] %vm824, %v779
          %835 = vst.msk [vmem:[#allocation4 + $0x50] sm:$0xff] %vm824, %v781
          %836 = vst.msk [vmem:[#allocation4 + $0x58] sm:$0xff] %vm824, %v783
          %837 = vst.msk [vmem:[#allocation4 + $0x60] sm:$0xff] %vm824, %v785
          %838 = vst.msk [vmem:[#allocation4 + $0x68] sm:$0xff] %vm824, %v787
          %839 = vst.msk [vmem:[#allocation4 + $0x70] sm:$0xff] %vm824, %v789
          %840 = vst.msk [vmem:[#allocation4 + $0x78] sm:$0xff] %vm824, %v791
          %841 = vst.msk [vmem:[#allocation4 + $0x80] sm:$0xff] %vm824, %v793
          %842 = vst.msk [vmem:[#allocation4 + $0x88] sm:$0xff] %vm824, %v795
          %843 = vst.msk [vmem:[#allocation4 + $0x90] sm:$0xff] %vm824, %v797
          %844 = vst.msk [vmem:[#allocation4 + $0x98] sm:$0xff] %vm824, %v799
          %845 = vst.msk [vmem:[#allocation4 + $0xa0] sm:$0xff] %vm824, %v801
          %846 = vst.msk [vmem:[#allocation4 + $0xa8] sm:$0xff] %vm824, %v803
          %847 = vst.msk [vmem:[#allocation4 + $0xb0] sm:$0xff] %vm824, %v805
          %848 = vst.msk [vmem:[#allocation4 + $0xb8] sm:$0xff] %vm824, %v807
          %849 = vst.msk [vmem:[#allocation4 + $0xc0] sm:$0xff] %vm824, %v809
          %850 = vst.msk [vmem:[#allocation4 + $0xc8] sm:$0xff] %vm824, %v811
          %851 = vst.msk [vmem:[#allocation4 + $0xd0] sm:$0xff] %vm824, %v813
          %852 = vst.msk [vmem:[#allocation4 + $0xd8] sm:$0xff] %vm824, %v815
          %853 = vst.msk [vmem:[#allocation4 + $0xe0] sm:$0xff] %vm824, %v817
          %854 = vst.msk [vmem:[#allocation4 + $0xe8] sm:$0xff] %vm824, %v819
          %855 = vst.msk [vmem:[#allocation4 + $0xf0] sm:$0xff] %vm824, %v821
          %856 = vst.msk [vmem:[#allocation4 + $0xf8] sm:$0xff] %vm824, %v823
        $region60: #{tpu_custom_call.1} parent=43 // pred_fallthru
          _
        %s857 = smul.u32 %s22, 128
        %s858 = scalar_lea.vmem [#allocation4], %s857
        %v859 = vld [vmem:[%s858] sm:$0xff]
        %v860 = vld [vmem:[%s858 + $0x8] sm:$0xff]
        %v861 = vld [vmem:[%s858 + $0x10] sm:$0xff]
        %v862 = vld [vmem:[%s858 + $0x18] sm:$0xff]
        %v863 = vld [vmem:[%s858 + $0x20] sm:$0xff]
        %v864 = vld [vmem:[%s858 + $0x28] sm:$0xff]
        %v865 = vld [vmem:[%s858 + $0x30] sm:$0xff]
        %v866 = vld [vmem:[%s858 + $0x38] sm:$0xff]
        %v867 = vld [vmem:[%s858 + $0x40] sm:$0xff]
        %v868 = vld [vmem:[%s858 + $0x48] sm:$0xff]
        %v869 = vld [vmem:[%s858 + $0x50] sm:$0xff]
        %v870 = vld [vmem:[%s858 + $0x58] sm:$0xff]
        %v871 = vld [vmem:[%s858 + $0x60] sm:$0xff]
        %v872 = vld [vmem:[%s858 + $0x68] sm:$0xff]
        %v873 = vld [vmem:[%s858 + $0x70] sm:$0xff]
        %v874 = vld [vmem:[%s858 + $0x78] sm:$0xff]
        %v875 = vld [vmem:[#allocation3] sm:$0x3]
        %877 = vset.pattern.permute.xlu0 0
        %878 = vperm.xlu0 %877, %v859
        %v879 = vpop.permute.xlu0 %878
        %882 = vset.pattern.permute.xlu0 0
        %883 = vperm.xlu0 %882, %v860
        %v884 = vpop.permute.xlu0 %883
        %887 = vset.pattern.permute.xlu0 0
        %888 = vperm.xlu0 %887, %v861
        %v889 = vpop.permute.xlu0 %888
        %892 = vset.pattern.permute.xlu0 0
        %893 = vperm.xlu0 %892, %v862
        %v894 = vpop.permute.xlu0 %893
        %897 = vset.pattern.permute.xlu0 0
        %898 = vperm.xlu0 %897, %v863
        %v899 = vpop.permute.xlu0 %898
        %902 = vset.pattern.permute.xlu0 0
        %903 = vperm.xlu0 %902, %v864
        %v904 = vpop.permute.xlu0 %903
        %907 = vset.pattern.permute.xlu0 0
        %908 = vperm.xlu0 %907, %v865
        %v909 = vpop.permute.xlu0 %908
        %912 = vset.pattern.permute.xlu0 0
        %913 = vperm.xlu0 %912, %v866
        %v914 = vpop.permute.xlu0 %913
        %917 = vset.pattern.permute.xlu0 0
        %918 = vperm.xlu0 %917, %v867
        %v919 = vpop.permute.xlu0 %918
        %922 = vset.pattern.permute.xlu0 0
        %923 = vperm.xlu0 %922, %v868
        %v924 = vpop.permute.xlu0 %923
        %927 = vset.pattern.permute.xlu0 0
        %928 = vperm.xlu0 %927, %v869
        %v929 = vpop.permute.xlu0 %928
        %932 = vset.pattern.permute.xlu0 0
        %933 = vperm.xlu0 %932, %v870
        %v934 = vpop.permute.xlu0 %933
        %937 = vset.pattern.permute.xlu0 0
        %938 = vperm.xlu0 %937, %v871
        %v939 = vpop.permute.xlu0 %938
        %942 = vset.pattern.permute.xlu0 0
        %943 = vperm.xlu0 %942, %v872
        %v944 = vpop.permute.xlu0 %943
        %947 = vset.pattern.permute.xlu0 0
        %948 = vperm.xlu0 %947, %v873
        %v949 = vpop.permute.xlu0 %948
        %952 = vset.pattern.permute.xlu0 0
        %953 = vperm.xlu0 %952, %v874
        %v954 = vpop.permute.xlu0 %953
        %v957 = vperm.slane %v875, 0
        %v958 = vperm.slane %v875, 1
        %v961 = vadd.f32 %v879, %v957
        %v962 = vadd.f32 %v879, %v958
        %v963 = vadd.f32 %v884, %v957
        %v964 = vadd.f32 %v884, %v958
        %v965 = vadd.f32 %v889, %v957
        %v966 = vadd.f32 %v889, %v958
        %v967 = vadd.f32 %v894, %v957
        %v968 = vadd.f32 %v894, %v958
        %v969 = vadd.f32 %v899, %v957
        %v970 = vadd.f32 %v899, %v958
        %v971 = vadd.f32 %v904, %v957
        %v972 = vadd.f32 %v904, %v958
        %v973 = vadd.f32 %v909, %v957
        %v974 = vadd.f32 %v909, %v958
        %v975 = vadd.f32 %v914, %v957
        %v976 = vadd.f32 %v914, %v958
        %v977 = vadd.f32 %v919, %v957
        %v978 = vadd.f32 %v919, %v958
        %v979 = vadd.f32 %v924, %v957
        %v980 = vadd.f32 %v924, %v958
        %v981 = vadd.f32 %v929, %v957
        %v982 = vadd.f32 %v929, %v958
        %v983 = vadd.f32 %v934, %v957
        %v984 = vadd.f32 %v934, %v958
        %v985 = vadd.f32 %v939, %v957
        %v986 = vadd.f32 %v939, %v958
        %v987 = vadd.f32 %v944, %v957
        %v988 = vadd.f32 %v944, %v958
        %v989 = vadd.f32 %v949, %v957
        %v990 = vadd.f32 %v949, %v958
        %v991 = vadd.f32 %v954, %v957
        %v992 = vadd.f32 %v954, %v958
        %vm993 = vcmp.gt.f32.partialorder %v961, 0.0
        %vm994 = vcmp.gt.f32.partialorder %v962, 0.0
        %vm995 = vcmp.gt.f32.partialorder %v963, 0.0
        %vm996 = vcmp.gt.f32.partialorder %v964, 0.0
        %vm997 = vcmp.gt.f32.partialorder %v965, 0.0
        %vm998 = vcmp.gt.f32.partialorder %v966, 0.0
        %vm999 = vcmp.gt.f32.partialorder %v967, 0.0
        %vm1000 = vcmp.gt.f32.partialorder %v968, 0.0
        %vm1001 = vcmp.gt.f32.partialorder %v969, 0.0
        %vm1002 = vcmp.gt.f32.partialorder %v970, 0.0
        %vm1003 = vcmp.gt.f32.partialorder %v971, 0.0
        %vm1004 = vcmp.gt.f32.partialorder %v972, 0.0
        %vm1005 = vcmp.gt.f32.partialorder %v973, 0.0
        %vm1006 = vcmp.gt.f32.partialorder %v974, 0.0
        %vm1007 = vcmp.gt.f32.partialorder %v975, 0.0
        %vm1008 = vcmp.gt.f32.partialorder %v976, 0.0
        %vm1009 = vcmp.gt.f32.partialorder %v977, 0.0
        %vm1010 = vcmp.gt.f32.partialorder %v978, 0.0
        %vm1011 = vcmp.gt.f32.partialorder %v979, 0.0
        %vm1012 = vcmp.gt.f32.partialorder %v980, 0.0
        %vm1013 = vcmp.gt.f32.partialorder %v981, 0.0
        %vm1014 = vcmp.gt.f32.partialorder %v982, 0.0
        %vm1015 = vcmp.gt.f32.partialorder %v983, 0.0
        %vm1016 = vcmp.gt.f32.partialorder %v984, 0.0
        %vm1017 = vcmp.gt.f32.partialorder %v985, 0.0
        %vm1018 = vcmp.gt.f32.partialorder %v986, 0.0
        %vm1019 = vcmp.gt.f32.partialorder %v987, 0.0
        %vm1020 = vcmp.gt.f32.partialorder %v988, 0.0
        %vm1021 = vcmp.gt.f32.partialorder %v989, 0.0
        %vm1022 = vcmp.gt.f32.partialorder %v990, 0.0
        %vm1023 = vcmp.gt.f32.partialorder %v991, 0.0
        %vm1024 = vcmp.gt.f32.partialorder %v992, 0.0
        %v1025 = vmul.f32 %v961, 0.2
        %v1026 = vmul.f32 %v962, 0.2
        %v1027 = vmul.f32 %v963, 0.2
        %v1028 = vmul.f32 %v964, 0.2
        %v1029 = vmul.f32 %v965, 0.2
        %v1030 = vmul.f32 %v966, 0.2
        %v1031 = vmul.f32 %v967, 0.2
        %v1032 = vmul.f32 %v968, 0.2
        %v1033 = vmul.f32 %v969, 0.2
        %v1034 = vmul.f32 %v970, 0.2
        %v1035 = vmul.f32 %v971, 0.2
        %v1036 = vmul.f32 %v972, 0.2
        %v1037 = vmul.f32 %v973, 0.2
        %v1038 = vmul.f32 %v974, 0.2
        %v1039 = vmul.f32 %v975, 0.2
        %v1040 = vmul.f32 %v976, 0.2
        %v1041 = vmul.f32 %v977, 0.2
        %v1042 = vmul.f32 %v978, 0.2
        %v1043 = vmul.f32 %v979, 0.2
        %v1044 = vmul.f32 %v980, 0.2
        %v1045 = vmul.f32 %v981, 0.2
        %v1046 = vmul.f32 %v982, 0.2
        %v1047 = vmul.f32 %v983, 0.2
        %v1048 = vmul.f32 %v984, 0.2
        %v1049 = vmul.f32 %v985, 0.2
        %v1050 = vmul.f32 %v986, 0.2
        %v1051 = vmul.f32 %v987, 0.2
        %v1052 = vmul.f32 %v988, 0.2
        %v1053 = vmul.f32 %v989, 0.2
        %v1054 = vmul.f32 %v990, 0.2
        %v1055 = vmul.f32 %v991, 0.2
        %v1056 = vmul.f32 %v992, 0.2
        %v1057 = vsel %vm993, %v961, %v1025
        %v1058 = vsel %vm994, %v962, %v1026
        %v1059 = vsel %vm995, %v963, %v1027
        %v1060 = vsel %vm996, %v964, %v1028
        %v1061 = vsel %vm997, %v965, %v1029
        %v1062 = vsel %vm998, %v966, %v1030
        %v1063 = vsel %vm999, %v967, %v1031
        %v1064 = vsel %vm1000, %v968, %v1032
        %v1065 = vsel %vm1001, %v969, %v1033
        %v1066 = vsel %vm1002, %v970, %v1034
        %v1067 = vsel %vm1003, %v971, %v1035
        %v1068 = vsel %vm1004, %v972, %v1036
        %v1069 = vsel %vm1005, %v973, %v1037
        %v1070 = vsel %vm1006, %v974, %v1038
        %v1071 = vsel %vm1007, %v975, %v1039
        %v1072 = vsel %vm1008, %v976, %v1040
        %v1073 = vsel %vm1009, %v977, %v1041
        %v1074 = vsel %vm1010, %v978, %v1042
        %v1075 = vsel %vm1011, %v979, %v1043
        %v1076 = vsel %vm1012, %v980, %v1044
        %v1077 = vsel %vm1013, %v981, %v1045
        %v1078 = vsel %vm1014, %v982, %v1046
        %v1079 = vsel %vm1015, %v983, %v1047
        %v1080 = vsel %vm1016, %v984, %v1048
        %v1081 = vsel %vm1017, %v985, %v1049
        %v1082 = vsel %vm1018, %v986, %v1050
        %v1083 = vsel %vm1019, %v987, %v1051
        %v1084 = vsel %vm1020, %v988, %v1052
        %v1085 = vsel %vm1021, %v989, %v1053
        %v1086 = vsel %vm1022, %v990, %v1054
        %v1087 = vsel %vm1023, %v991, %v1055
        %v1088 = vsel %vm1024, %v992, %v1056
        %v1089 = vld [vmem:[%s274] sm:$0xff]
        %v1090 = vld [vmem:[%s274 + $0x8] sm:$0xff]
        %v1091 = vld [vmem:[%s274 + $0x10] sm:$0xff]
        %v1092 = vld [vmem:[%s274 + $0x18] sm:$0xff]
        %v1093 = vld [vmem:[%s274 + $0x20] sm:$0xff]
        %v1094 = vld [vmem:[%s274 + $0x28] sm:$0xff]
        %v1095 = vld [vmem:[%s274 + $0x30] sm:$0xff]
        %v1096 = vld [vmem:[%s274 + $0x38] sm:$0xff]
        %v1097 = vunpack.c.0.s8 %v1089
        %v1098 = vunpack.c.0.s8 %v1090
        %v1099 = vunpack.c.1.s8 %v1089
        %v1100 = vunpack.c.1.s8 %v1090
        %v1101 = vunpack.c.2.s8 %v1089
        %v1102 = vunpack.c.2.s8 %v1090
        %v1103 = vunpack.c.3.s8 %v1089
        %v1104 = vunpack.c.3.s8 %v1090
        %v1105 = vunpack.c.0.s8 %v1091
        %v1106 = vunpack.c.0.s8 %v1092
        %v1107 = vunpack.c.1.s8 %v1091
        %v1108 = vunpack.c.1.s8 %v1092
        %v1109 = vunpack.c.2.s8 %v1091
        %v1110 = vunpack.c.2.s8 %v1092
        %v1111 = vunpack.c.3.s8 %v1091
        %v1112 = vunpack.c.3.s8 %v1092
        %v1113 = vunpack.c.0.s8 %v1093
        %v1114 = vunpack.c.0.s8 %v1094
        %v1115 = vunpack.c.1.s8 %v1093
        %v1116 = vunpack.c.1.s8 %v1094
        %v1117 = vunpack.c.2.s8 %v1093
        %v1118 = vunpack.c.2.s8 %v1094
        %v1119 = vunpack.c.3.s8 %v1093
        %v1120 = vunpack.c.3.s8 %v1094
        %v1121 = vunpack.c.0.s8 %v1095
        %v1122 = vunpack.c.0.s8 %v1096
        %v1123 = vunpack.c.1.s8 %v1095
        %v1124 = vunpack.c.1.s8 %v1096
        %v1125 = vunpack.c.2.s8 %v1095
        %v1126 = vunpack.c.2.s8 %v1096
        %v1127 = vunpack.c.3.s8 %v1095
        %v1128 = vunpack.c.3.s8 %v1096
        %v1129 = vcvt.s32.f32 %v1097
        %v1130 = vcvt.s32.f32 %v1098
        %v1131 = vcvt.s32.f32 %v1099
        %v1132 = vcvt.s32.f32 %v1100
        %v1133 = vcvt.s32.f32 %v1101
        %v1134 = vcvt.s32.f32 %v1102
        %v1135 = vcvt.s32.f32 %v1103
        %v1136 = vcvt.s32.f32 %v1104
        %v1137 = vcvt.s32.f32 %v1105
        %v1138 = vcvt.s32.f32 %v1106
        %v1139 = vcvt.s32.f32 %v1107
        %v1140 = vcvt.s32.f32 %v1108
        %v1141 = vcvt.s32.f32 %v1109
        %v1142 = vcvt.s32.f32 %v1110
        %v1143 = vcvt.s32.f32 %v1111
        %v1144 = vcvt.s32.f32 %v1112
        %v1145 = vcvt.s32.f32 %v1113
        %v1146 = vcvt.s32.f32 %v1114
        %v1147 = vcvt.s32.f32 %v1115
        %v1148 = vcvt.s32.f32 %v1116
        %v1149 = vcvt.s32.f32 %v1117
        %v1150 = vcvt.s32.f32 %v1118
        %v1151 = vcvt.s32.f32 %v1119
        %v1152 = vcvt.s32.f32 %v1120
        %v1153 = vcvt.s32.f32 %v1121
        %v1154 = vcvt.s32.f32 %v1122
        %v1155 = vcvt.s32.f32 %v1123
        %v1156 = vcvt.s32.f32 %v1124
        %v1157 = vcvt.s32.f32 %v1125
        %v1158 = vcvt.s32.f32 %v1126
        %v1159 = vcvt.s32.f32 %v1127
        %v1160 = vcvt.s32.f32 %v1128
        %vm1161 = vcmp.ne.f32.partialorder %v1129, 0.0
        %vm1162 = vcmp.ne.f32.partialorder %v1130, 0.0
        %vm1163 = vcmp.ne.f32.partialorder %v1131, 0.0
        %vm1164 = vcmp.ne.f32.partialorder %v1132, 0.0
        %vm1165 = vcmp.ne.f32.partialorder %v1133, 0.0
        %vm1166 = vcmp.ne.f32.partialorder %v1134, 0.0
        %vm1167 = vcmp.ne.f32.partialorder %v1135, 0.0
        %vm1168 = vcmp.ne.f32.partialorder %v1136, 0.0
        %vm1169 = vcmp.ne.f32.partialorder %v1137, 0.0
        %vm1170 = vcmp.ne.f32.partialorder %v1138, 0.0
        %vm1171 = vcmp.ne.f32.partialorder %v1139, 0.0
        %vm1172 = vcmp.ne.f32.partialorder %v1140, 0.0
        %vm1173 = vcmp.ne.f32.partialorder %v1141, 0.0
        %vm1174 = vcmp.ne.f32.partialorder %v1142, 0.0
        %vm1175 = vcmp.ne.f32.partialorder %v1143, 0.0
        %vm1176 = vcmp.ne.f32.partialorder %v1144, 0.0
        %vm1177 = vcmp.ne.f32.partialorder %v1145, 0.0
        %vm1178 = vcmp.ne.f32.partialorder %v1146, 0.0
        %vm1179 = vcmp.ne.f32.partialorder %v1147, 0.0
        %vm1180 = vcmp.ne.f32.partialorder %v1148, 0.0
        %vm1181 = vcmp.ne.f32.partialorder %v1149, 0.0
        %vm1182 = vcmp.ne.f32.partialorder %v1150, 0.0
        %vm1183 = vcmp.ne.f32.partialorder %v1151, 0.0
        %vm1184 = vcmp.ne.f32.partialorder %v1152, 0.0
        %vm1185 = vcmp.ne.f32.partialorder %v1153, 0.0
        %vm1186 = vcmp.ne.f32.partialorder %v1154, 0.0
        %vm1187 = vcmp.ne.f32.partialorder %v1155, 0.0
        %vm1188 = vcmp.ne.f32.partialorder %v1156, 0.0
        %vm1189 = vcmp.ne.f32.partialorder %v1157, 0.0
        %vm1190 = vcmp.ne.f32.partialorder %v1158, 0.0
        %vm1191 = vcmp.ne.f32.partialorder %v1159, 0.0
        %vm1192 = vcmp.ne.f32.partialorder %v1160, 0.0
        %v1193 = vsel %vm1161, %v1057, -1e+30
        %v1194 = vsel %vm1162, %v1058, -1e+30
        %v1195 = vsel %vm1163, %v1059, -1e+30
        %v1196 = vsel %vm1164, %v1060, -1e+30
        %v1197 = vsel %vm1165, %v1061, -1e+30
        %v1198 = vsel %vm1166, %v1062, -1e+30
        %v1199 = vsel %vm1167, %v1063, -1e+30
        %v1200 = vsel %vm1168, %v1064, -1e+30
        %v1201 = vsel %vm1169, %v1065, -1e+30
        %v1202 = vsel %vm1170, %v1066, -1e+30
        %v1203 = vsel %vm1171, %v1067, -1e+30
        %v1204 = vsel %vm1172, %v1068, -1e+30
        %v1205 = vsel %vm1173, %v1069, -1e+30
        %v1206 = vsel %vm1174, %v1070, -1e+30
        %v1207 = vsel %vm1175, %v1071, -1e+30
        %v1208 = vsel %vm1176, %v1072, -1e+30
        %v1209 = vsel %vm1177, %v1073, -1e+30
        %v1210 = vsel %vm1178, %v1074, -1e+30
        %v1211 = vsel %vm1179, %v1075, -1e+30
        %v1212 = vsel %vm1180, %v1076, -1e+30
        %v1213 = vsel %vm1181, %v1077, -1e+30
        %v1214 = vsel %vm1182, %v1078, -1e+30
        %v1215 = vsel %vm1183, %v1079, -1e+30
        %v1216 = vsel %vm1184, %v1080, -1e+30
        %v1217 = vsel %vm1185, %v1081, -1e+30
        %v1218 = vsel %vm1186, %v1082, -1e+30
        %v1219 = vsel %vm1187, %v1083, -1e+30
        %v1220 = vsel %vm1188, %v1084, -1e+30
        %v1221 = vsel %vm1189, %v1085, -1e+30
        %v1222 = vsel %vm1190, %v1086, -1e+30
        %v1223 = vsel %vm1191, %v1087, -1e+30
        %v1224 = vsel %vm1192, %v1088, -1e+30
        %v1225 = vmax.f32 %v1193, %v1194
        %1226 = vmax.xlane.f32.xlu0 %v1225
        %v1227 = vpop.xlane.xlu0 %1226
        %v1228 = vmax.f32 %v1195, %v1196
        %1229 = vmax.xlane.f32.xlu0 %v1228
        %v1230 = vpop.xlane.xlu0 %1229
        %v1231 = vmax.f32 %v1197, %v1198
        %1232 = vmax.xlane.f32.xlu0 %v1231
        %v1233 = vpop.xlane.xlu0 %1232
        %v1234 = vmax.f32 %v1199, %v1200
        %1235 = vmax.xlane.f32.xlu0 %v1234
        %v1236 = vpop.xlane.xlu0 %1235
        %v1237 = vmax.f32 %v1201, %v1202
        %1238 = vmax.xlane.f32.xlu0 %v1237
        %v1239 = vpop.xlane.xlu0 %1238
        %v1240 = vmax.f32 %v1203, %v1204
        %1241 = vmax.xlane.f32.xlu0 %v1240
        %v1242 = vpop.xlane.xlu0 %1241
        %v1243 = vmax.f32 %v1205, %v1206
        %1244 = vmax.xlane.f32.xlu0 %v1243
        %v1245 = vpop.xlane.xlu0 %1244
        %v1246 = vmax.f32 %v1207, %v1208
        %1247 = vmax.xlane.f32.xlu0 %v1246
        %v1248 = vpop.xlane.xlu0 %1247
        %v1249 = vmax.f32 %v1209, %v1210
        %1250 = vmax.xlane.f32.xlu0 %v1249
        %v1251 = vpop.xlane.xlu0 %1250
        %v1252 = vmax.f32 %v1211, %v1212
        %1253 = vmax.xlane.f32.xlu0 %v1252
        %v1254 = vpop.xlane.xlu0 %1253
        %v1255 = vmax.f32 %v1213, %v1214
        %1256 = vmax.xlane.f32.xlu0 %v1255
        %v1257 = vpop.xlane.xlu0 %1256
        %v1258 = vmax.f32 %v1215, %v1216
        %1259 = vmax.xlane.f32.xlu0 %v1258
        %v1260 = vpop.xlane.xlu0 %1259
        %v1261 = vmax.f32 %v1217, %v1218
        %1262 = vmax.xlane.f32.xlu0 %v1261
        %v1263 = vpop.xlane.xlu0 %1262
        %v1264 = vmax.f32 %v1219, %v1220
        %1265 = vmax.xlane.f32.xlu0 %v1264
        %v1266 = vpop.xlane.xlu0 %1265
        %v1267 = vmax.f32 %v1221, %v1222
        %1268 = vmax.xlane.f32.xlu0 %v1267
        %v1269 = vpop.xlane.xlu0 %1268
        %v1270 = vmax.f32 %v1223, %v1224
        %1271 = vmax.xlane.f32.xlu0 %v1270
        %v1272 = vpop.xlane.xlu0 %1271
        %v1273 = vsub.f32 %v1193, %v1227
        %v1274 = vsub.f32 %v1194, %v1227
        %v1275 = vsub.f32 %v1195, %v1230
        %v1276 = vsub.f32 %v1196, %v1230
        %v1277 = vsub.f32 %v1197, %v1233
        %v1278 = vsub.f32 %v1198, %v1233
        %v1279 = vsub.f32 %v1199, %v1236
        %v1280 = vsub.f32 %v1200, %v1236
        %v1281 = vsub.f32 %v1201, %v1239
        %v1282 = vsub.f32 %v1202, %v1239
        %v1283 = vsub.f32 %v1203, %v1242
        %v1284 = vsub.f32 %v1204, %v1242
        %v1285 = vsub.f32 %v1205, %v1245
        %v1286 = vsub.f32 %v1206, %v1245
        %v1287 = vsub.f32 %v1207, %v1248
        %v1288 = vsub.f32 %v1208, %v1248
        %v1289 = vsub.f32 %v1209, %v1251
        %v1290 = vsub.f32 %v1210, %v1251
        %v1291 = vsub.f32 %v1211, %v1254
        %v1292 = vsub.f32 %v1212, %v1254
        %v1293 = vsub.f32 %v1213, %v1257
        %v1294 = vsub.f32 %v1214, %v1257
        %v1295 = vsub.f32 %v1215, %v1260
        %v1296 = vsub.f32 %v1216, %v1260
        %v1297 = vsub.f32 %v1217, %v1263
        %v1298 = vsub.f32 %v1218, %v1263
        %v1299 = vsub.f32 %v1219, %v1266
        %v1300 = vsub.f32 %v1220, %v1266
        %v1301 = vsub.f32 %v1221, %v1269
        %v1302 = vsub.f32 %v1222, %v1269
        %v1303 = vsub.f32 %v1223, %v1272
        %v1304 = vsub.f32 %v1224, %v1272
        %v1305 = vmul.f32 %v1273, 1.442695
        %v1306 = vpow.pop %v1305
        %v1307 = vmul.f32 %v1274, 1.442695
        %v1308 = vpow.pop %v1307
        %v1309 = vmul.f32 %v1275, 1.442695
        %v1310 = vpow.pop %v1309
        %v1311 = vmul.f32 %v1276, 1.442695
        %v1312 = vpow.pop %v1311
        %v1313 = vmul.f32 %v1277, 1.442695
        %v1314 = vpow.pop %v1313
        %v1315 = vmul.f32 %v1278, 1.442695
        %v1316 = vpow.pop %v1315
        %v1317 = vmul.f32 %v1279, 1.442695
        %v1318 = vpow.pop %v1317
        %v1319 = vmul.f32 %v1280, 1.442695
        %v1320 = vpow.pop %v1319
        %v1321 = vmul.f32 %v1281, 1.442695
        %v1322 = vpow.pop %v1321
        %v1323 = vmul.f32 %v1282, 1.442695
        %v1324 = vpow.pop %v1323
        %v1325 = vmul.f32 %v1283, 1.442695
        %v1326 = vpow.pop %v1325
        %v1327 = vmul.f32 %v1284, 1.442695
        %v1328 = vpow.pop %v1327
        %v1329 = vmul.f32 %v1285, 1.442695
        %v1330 = vpow.pop %v1329
        %v1331 = vmul.f32 %v1286, 1.442695
        %v1332 = vpow.pop %v1331
        %v1333 = vmul.f32 %v1287, 1.442695
        %v1334 = vpow.pop %v1333
        %v1335 = vmul.f32 %v1288, 1.442695
        %v1336 = vpow.pop %v1335
        %v1337 = vmul.f32 %v1289, 1.442695
        %v1338 = vpow.pop %v1337
        %v1339 = vmul.f32 %v1290, 1.442695
        %v1340 = vpow.pop %v1339
        %v1341 = vmul.f32 %v1291, 1.442695
        %v1342 = vpow.pop %v1341
        %v1343 = vmul.f32 %v1292, 1.442695
        %v1344 = vpow.pop %v1343
        %v1345 = vmul.f32 %v1293, 1.442695
        %v1346 = vpow.pop %v1345
        %v1347 = vmul.f32 %v1294, 1.442695
        %v1348 = vpow.pop %v1347
        %v1349 = vmul.f32 %v1295, 1.442695
        %v1350 = vpow.pop %v1349
        %v1351 = vmul.f32 %v1296, 1.442695
        %v1352 = vpow.pop %v1351
        %v1353 = vmul.f32 %v1297, 1.442695
        %v1354 = vpow.pop %v1353
        %v1355 = vmul.f32 %v1298, 1.442695
        %v1356 = vpow.pop %v1355
        %v1357 = vmul.f32 %v1299, 1.442695
        %v1358 = vpow.pop %v1357
        %v1359 = vmul.f32 %v1300, 1.442695
        %v1360 = vpow.pop %v1359
        %v1361 = vmul.f32 %v1301, 1.442695
        %v1362 = vpow.pop %v1361
        %v1363 = vmul.f32 %v1302, 1.442695
        %v1364 = vpow.pop %v1363
        %v1365 = vmul.f32 %v1303, 1.442695
        %v1366 = vpow.pop %v1365
        %v1367 = vmul.f32 %v1304, 1.442695
        %v1368 = vpow.pop %v1367
        %v1369 = vadd.f32 %v1306, %v1308
        %1370 = vadd.xlane.f32.xlu0 %v1369
        %v1371 = vpop.xlane.xlu0 %1370
        %v1372 = vadd.f32 %v1310, %v1312
        %1373 = vadd.xlane.f32.xlu0 %v1372
        %v1374 = vpop.xlane.xlu0 %1373
        %v1375 = vadd.f32 %v1314, %v1316
        %1376 = vadd.xlane.f32.xlu0 %v1375
        %v1377 = vpop.xlane.xlu0 %1376
        %v1378 = vadd.f32 %v1318, %v1320
        %1379 = vadd.xlane.f32.xlu0 %v1378
        %v1380 = vpop.xlane.xlu0 %1379
        %v1381 = vadd.f32 %v1322, %v1324
        %1382 = vadd.xlane.f32.xlu0 %v1381
        %v1383 = vpop.xlane.xlu0 %1382
        %v1384 = vadd.f32 %v1326, %v1328
        %1385 = vadd.xlane.f32.xlu0 %v1384
        %v1386 = vpop.xlane.xlu0 %1385
        %v1387 = vadd.f32 %v1330, %v1332
        %1388 = vadd.xlane.f32.xlu0 %v1387
        %v1389 = vpop.xlane.xlu0 %1388
        %v1390 = vadd.f32 %v1334, %v1336
        %1391 = vadd.xlane.f32.xlu0 %v1390
        %v1392 = vpop.xlane.xlu0 %1391
        %v1393 = vadd.f32 %v1338, %v1340
        %1394 = vadd.xlane.f32.xlu0 %v1393
        %v1395 = vpop.xlane.xlu0 %1394
        %v1396 = vadd.f32 %v1342, %v1344
        %1397 = vadd.xlane.f32.xlu0 %v1396
        %v1398 = vpop.xlane.xlu0 %1397
        %v1399 = vadd.f32 %v1346, %v1348
        %1400 = vadd.xlane.f32.xlu0 %v1399
        %v1401 = vpop.xlane.xlu0 %1400
        %v1402 = vadd.f32 %v1350, %v1352
        %1403 = vadd.xlane.f32.xlu0 %v1402
        %v1404 = vpop.xlane.xlu0 %1403
        %v1405 = vadd.f32 %v1354, %v1356
        %1406 = vadd.xlane.f32.xlu0 %v1405
        %v1407 = vpop.xlane.xlu0 %1406
        %v1408 = vadd.f32 %v1358, %v1360
        %1409 = vadd.xlane.f32.xlu0 %v1408
        %v1410 = vpop.xlane.xlu0 %1409
        %v1411 = vadd.f32 %v1362, %v1364
        %1412 = vadd.xlane.f32.xlu0 %v1411
        %v1413 = vpop.xlane.xlu0 %1412
        %v1414 = vadd.f32 %v1366, %v1368
        %1415 = vadd.xlane.f32.xlu0 %v1414
        %v1416 = vpop.xlane.xlu0 %1415
        %v1417 = vmax.f32 %v1371, 1e-20
        %v1418 = vmax.f32 %v1374, 1e-20
        %v1419 = vmax.f32 %v1377, 1e-20
        %v1420 = vmax.f32 %v1380, 1e-20
        %v1421 = vmax.f32 %v1383, 1e-20
        %v1422 = vmax.f32 %v1386, 1e-20
        %v1423 = vmax.f32 %v1389, 1e-20
        %v1424 = vmax.f32 %v1392, 1e-20
        %v1425 = vmax.f32 %v1395, 1e-20
        %v1426 = vmax.f32 %v1398, 1e-20
        %v1427 = vmax.f32 %v1401, 1e-20
        %v1428 = vmax.f32 %v1404, 1e-20
        %v1429 = vmax.f32 %v1407, 1e-20
        %v1430 = vmax.f32 %v1410, 1e-20
        %v1431 = vmax.f32 %v1413, 1e-20
        %v1432 = vmax.f32 %v1416, 1e-20
        %v1433 = vpack.c.bf16 %v1310, %v1306
        %v1434 = vpack.c.bf16 %v1312, %v1308
        %v1435 = vpack.c.bf16 %v1318, %v1314
        %v1436 = vpack.c.bf16 %v1320, %v1316
        %v1437 = vpack.c.bf16 %v1326, %v1322
        %v1438 = vpack.c.bf16 %v1328, %v1324
        %v1439 = vpack.c.bf16 %v1334, %v1330
        %v1440 = vpack.c.bf16 %v1336, %v1332
        %v1441 = vpack.c.bf16 %v1342, %v1338
        %v1442 = vpack.c.bf16 %v1344, %v1340
        %v1443 = vpack.c.bf16 %v1350, %v1346
        %v1444 = vpack.c.bf16 %v1352, %v1348
        %v1445 = vpack.c.bf16 %v1358, %v1354
        %v1446 = vpack.c.bf16 %v1360, %v1356
        %v1447 = vpack.c.bf16 %v1366, %v1362
        %v1448 = vpack.c.bf16 %v1368, %v1364
        %v1449 = vld [vmem:[#allocation2] sm:$0xf]
        %v1450 = vld [vmem:[#allocation2 + $0x4] sm:$0xf]
        %v1451 = vld [vmem:[#allocation2 + $0x8] sm:$0xf]
        %v1452 = vld [vmem:[#allocation2 + $0xc] sm:$0xf]
        %v1453 = vld [vmem:[#allocation2 + $0x10] sm:$0xf]
        %v1454 = vld [vmem:[#allocation2 + $0x14] sm:$0xf]
        %v1455 = vld [vmem:[#allocation2 + $0x18] sm:$0xf]
        %v1456 = vld [vmem:[#allocation2 + $0x1c] sm:$0xf]
        %v1457 = vld [vmem:[#allocation2 + $0x20] sm:$0xf]
        %v1458 = vld [vmem:[#allocation2 + $0x24] sm:$0xf]
        %v1459 = vld [vmem:[#allocation2 + $0x28] sm:$0xf]
        %v1460 = vld [vmem:[#allocation2 + $0x2c] sm:$0xf]
        %v1461 = vld [vmem:[#allocation2 + $0x30] sm:$0xf]
        %v1462 = vld [vmem:[#allocation2 + $0x34] sm:$0xf]
        %v1463 = vld [vmem:[#allocation2 + $0x38] sm:$0xf]
        %v1464 = vld [vmem:[#allocation2 + $0x3c] sm:$0xf]
        %v1465 = vld [vmem:[#allocation2 + $0x40] sm:$0xf]
        %v1466 = vld [vmem:[#allocation2 + $0x44] sm:$0xf]
        %v1467 = vld [vmem:[#allocation2 + $0x48] sm:$0xf]
        %v1468 = vld [vmem:[#allocation2 + $0x4c] sm:$0xf]
        %v1469 = vld [vmem:[#allocation2 + $0x50] sm:$0xf]
        %v1470 = vld [vmem:[#allocation2 + $0x54] sm:$0xf]
        %v1471 = vld [vmem:[#allocation2 + $0x58] sm:$0xf]
        %v1472 = vld [vmem:[#allocation2 + $0x5c] sm:$0xf]
        %v1473 = vld [vmem:[#allocation2 + $0x60] sm:$0xf]
        %v1474 = vld [vmem:[#allocation2 + $0x64] sm:$0xf]
        %v1475 = vld [vmem:[#allocation2 + $0x68] sm:$0xf]
        %v1476 = vld [vmem:[#allocation2 + $0x6c] sm:$0xf]
        %v1477 = vld [vmem:[#allocation2 + $0x70] sm:$0xf]
        %v1478 = vld [vmem:[#allocation2 + $0x74] sm:$0xf]
        %v1479 = vld [vmem:[#allocation2 + $0x78] sm:$0xf]
        %v1480 = vld [vmem:[#allocation2 + $0x7c] sm:$0xf]
        %v1513 = vunpack.c.l.b16 %v1449
        %v1514 = vunpack.c.l.b16 %v1450
        %v1515 = vunpack.c.l.b16 %v1451
        %v1516 = vunpack.c.l.b16 %v1452
        %v1517 = vunpack.c.l.b16 %v1453
        %v1518 = vunpack.c.l.b16 %v1454
        %v1519 = vunpack.c.l.b16 %v1455
        %v1520 = vunpack.c.l.b16 %v1456
        %v1521 = vunpack.c.l.b16 %v1457
        %v1522 = vunpack.c.l.b16 %v1458
        %v1523 = vunpack.c.l.b16 %v1459
        %v1524 = vunpack.c.l.b16 %v1460
        %v1525 = vunpack.c.l.b16 %v1461
        %v1526 = vunpack.c.l.b16 %v1462
        %v1527 = vunpack.c.l.b16 %v1463
        %v1528 = vunpack.c.l.b16 %v1464
        %v1529 = vunpack.c.l.b16 %v1465
        %v1530 = vunpack.c.l.b16 %v1466
        %v1531 = vunpack.c.l.b16 %v1467
        %v1532 = vunpack.c.l.b16 %v1468
        %v1533 = vunpack.c.l.b16 %v1469
        %v1534 = vunpack.c.l.b16 %v1470
        %v1535 = vunpack.c.l.b16 %v1471
        %v1536 = vunpack.c.l.b16 %v1472
        %v1537 = vunpack.c.l.b16 %v1473
        %v1538 = vunpack.c.l.b16 %v1474
        %v1539 = vunpack.c.l.b16 %v1475
        %v1540 = vunpack.c.l.b16 %v1476
        %v1541 = vunpack.c.l.b16 %v1477
        %v1542 = vunpack.c.l.b16 %v1478
        %v1543 = vunpack.c.l.b16 %v1479
        %v1544 = vunpack.c.l.b16 %v1480
        %v1545 = vpack.c.b16 %v1514, %v1513
        %v1546 = vpack.c.b16 %v1516, %v1515
        %v1547 = vpack.c.b16 %v1518, %v1517
        %v1548 = vpack.c.b16 %v1520, %v1519
        %v1549 = vpack.c.b16 %v1522, %v1521
        %v1550 = vpack.c.b16 %v1524, %v1523
        %v1551 = vpack.c.b16 %v1526, %v1525
        %v1552 = vpack.c.b16 %v1528, %v1527
        %v1553 = vpack.c.b16 %v1530, %v1529
        %v1554 = vpack.c.b16 %v1532, %v1531
        %v1555 = vpack.c.b16 %v1534, %v1533
        %v1556 = vpack.c.b16 %v1536, %v1535
        %v1557 = vpack.c.b16 %v1538, %v1537
        %v1558 = vpack.c.b16 %v1540, %v1539
        %v1559 = vpack.c.b16 %v1542, %v1541
        %v1560 = vpack.c.b16 %v1544, %v1543
        %1577 = vmatpush.bf16.msra.mxu0 %v1552
        %1578 = vmatpush.bf16.msra.mxu0 %v1551
        %1579 = vmatpush.bf16.msra.mxu0 %v1550
        %1580 = vmatpush.bf16.msra.mxu0 %v1549
        %1581 = vmatpush.bf16.msra.mxu0 %v1548
        %1582 = vmatpush.bf16.msra.mxu0 %v1547
        %1583 = vmatpush.bf16.msra.mxu0 %v1546
        %1584 = vmatpush.bf16.msra.mxu0 %v1545
        %1585 = vmatmul.bf16.gmra.mxu0 %v1433
        %v1586 = vpop.f32.mrf.mxu0
        %v1587 = vadd.f32 0.0, %v1586
        %v1588 = vpop.f32.mrf.mxu0
        %v1589 = vadd.f32 0.0, %v1588
        %1590 = vmatmul.bf16.gmra.mxu0 %v1435
        %v1591 = vpop.f32.mrf.mxu0
        %v1592 = vadd.f32 0.0, %v1591
        %v1593 = vpop.f32.mrf.mxu0
        %v1594 = vadd.f32 0.0, %v1593
        %1595 = vmatmul.bf16.gmra.mxu0 %v1437
        %v1596 = vpop.f32.mrf.mxu0
        %v1597 = vadd.f32 0.0, %v1596
        %v1598 = vpop.f32.mrf.mxu0
        %v1599 = vadd.f32 0.0, %v1598
        %1600 = vmatmul.bf16.gmra.mxu0 %v1439
        %v1601 = vpop.f32.mrf.mxu0
        %v1602 = vadd.f32 0.0, %v1601
        %v1603 = vpop.f32.mrf.mxu0
        %v1604 = vadd.f32 0.0, %v1603
        %1605 = vmatmul.bf16.gmra.mxu0 %v1441
        %v1606 = vpop.f32.mrf.mxu0
        %v1607 = vadd.f32 0.0, %v1606
        %v1608 = vpop.f32.mrf.mxu0
        %v1609 = vadd.f32 0.0, %v1608
        %1610 = vmatmul.bf16.gmra.mxu0 %v1443
        %v1611 = vpop.f32.mrf.mxu0
        %v1612 = vadd.f32 0.0, %v1611
        %v1613 = vpop.f32.mrf.mxu0
        %v1614 = vadd.f32 0.0, %v1613
        %1615 = vmatmul.bf16.gmra.mxu0 %v1445
        %v1616 = vpop.f32.mrf.mxu0
        %v1617 = vadd.f32 0.0, %v1616
        %v1618 = vpop.f32.mrf.mxu0
        %v1619 = vadd.f32 0.0, %v1618
        %1620 = vmatmul.bf16.gmra.mxu0 %v1447
        %v1621 = vpop.f32.mrf.mxu0
        %v1622 = vadd.f32 0.0, %v1621
        %v1623 = vpop.f32.mrf.mxu0
        %v1624 = vadd.f32 0.0, %v1623
        %1625 = vdwg.mxu0
        %1626 = vmatpush.bf16.msra.mxu0 %v1560
        %1627 = vmatpush.bf16.msra.mxu0 %v1559
        %1628 = vmatpush.bf16.msra.mxu0 %v1558
        %1629 = vmatpush.bf16.msra.mxu0 %v1557
        %1630 = vmatpush.bf16.msra.mxu0 %v1556
        %1631 = vmatpush.bf16.msra.mxu0 %v1555
        %1632 = vmatpush.bf16.msra.mxu0 %v1554
        %1633 = vmatpush.bf16.msra.mxu0 %v1553
        %1634 = vmatmul.bf16.gmra.mxu0 %v1434
        %v1635 = vpop.f32.mrf.mxu0
        %v1636 = vadd.f32 %v1587, %v1635
        %v1637 = vpop.f32.mrf.mxu0
        %v1638 = vadd.f32 %v1589, %v1637
        %1639 = vmatmul.bf16.gmra.mxu0 %v1436
        %v1640 = vpop.f32.mrf.mxu0
        %v1641 = vadd.f32 %v1592, %v1640
        %v1642 = vpop.f32.mrf.mxu0
        %v1643 = vadd.f32 %v1594, %v1642
        %1644 = vmatmul.bf16.gmra.mxu0 %v1438
        %v1645 = vpop.f32.mrf.mxu0
        %v1646 = vadd.f32 %v1597, %v1645
        %v1647 = vpop.f32.mrf.mxu0
        %v1648 = vadd.f32 %v1599, %v1647
        %1649 = vmatmul.bf16.gmra.mxu0 %v1440
        %v1650 = vpop.f32.mrf.mxu0
        %v1651 = vadd.f32 %v1602, %v1650
        %v1652 = vpop.f32.mrf.mxu0
        %v1653 = vadd.f32 %v1604, %v1652
        %1654 = vmatmul.bf16.gmra.mxu0 %v1442
        %v1655 = vpop.f32.mrf.mxu0
        %v1656 = vadd.f32 %v1607, %v1655
        %v1657 = vpop.f32.mrf.mxu0
        %v1658 = vadd.f32 %v1609, %v1657
        %1659 = vmatmul.bf16.gmra.mxu0 %v1444
        %v1660 = vpop.f32.mrf.mxu0
        %v1661 = vadd.f32 %v1612, %v1660
        %v1662 = vpop.f32.mrf.mxu0
        %v1663 = vadd.f32 %v1614, %v1662
        %1664 = vmatmul.bf16.gmra.mxu0 %v1446
        %v1665 = vpop.f32.mrf.mxu0
        %v1666 = vadd.f32 %v1617, %v1665
        %v1667 = vpop.f32.mrf.mxu0
        %v1668 = vadd.f32 %v1619, %v1667
        %1669 = vmatmul.bf16.gmra.mxu0 %v1448
        %v1670 = vpop.f32.mrf.mxu0
        %v1671 = vadd.f32 %v1622, %v1670
        %v1672 = vpop.f32.mrf.mxu0
        %v1673 = vadd.f32 %v1624, %v1672
        %1674 = vdwg.mxu0
        %v1675 = vrcp.pop %v1417
        %v1676 = vmul.f32 %v1417, %v1675
        %v1677 = vsub.f32 1.0, %v1676
        %v1678 = vmul.f32 %v1675, %v1677
        %v1679 = vadd.f32 %v1675, %v1678
        %vm1680 = vweird.f32 %v1417
        %vm1681 = vweird.f32 %v1675
        %vm1682 = vmor %vm1680, %vm1681
        %v1683 = vsel %vm1682, %v1675, %v1679
        %v1684 = vand.u32 2147483647, %v1417
        %vm1685 = vcmp.eq.f32.partialorder %v1684, 8.507059e+37
        %v1686 = vand.u32 %v1417, 2147483648
        %v1687 = vor.u32 1.1754944e-38, %v1686
        %v1688 = vsel %vm1685, %v1687, %v1683
        %v1689 = vrcp.pop %v1418
        %v1690 = vmul.f32 %v1418, %v1689
        %v1691 = vsub.f32 1.0, %v1690
        %v1692 = vmul.f32 %v1689, %v1691
        %v1693 = vadd.f32 %v1689, %v1692
        %vm1694 = vweird.f32 %v1418
        %vm1695 = vweird.f32 %v1689
        %vm1696 = vmor %vm1694, %vm1695
        %v1697 = vsel %vm1696, %v1689, %v1693
        %v1698 = vand.u32 2147483647, %v1418
        %vm1699 = vcmp.eq.f32.partialorder %v1698, 8.507059e+37
        %v1700 = vand.u32 %v1418, 2147483648
        %v1701 = vor.u32 1.1754944e-38, %v1700
        %v1702 = vsel %vm1699, %v1701, %v1697
        %v1703 = vrcp.pop %v1419
        %v1704 = vmul.f32 %v1419, %v1703
        %v1705 = vsub.f32 1.0, %v1704
        %v1706 = vmul.f32 %v1703, %v1705
        %v1707 = vadd.f32 %v1703, %v1706
        %vm1708 = vweird.f32 %v1419
        %vm1709 = vweird.f32 %v1703
        %vm1710 = vmor %vm1708, %vm1709
        %v1711 = vsel %vm1710, %v1703, %v1707
        %v1712 = vand.u32 2147483647, %v1419
        %vm1713 = vcmp.eq.f32.partialorder %v1712, 8.507059e+37
        %v1714 = vand.u32 %v1419, 2147483648
        %v1715 = vor.u32 1.1754944e-38, %v1714
        %v1716 = vsel %vm1713, %v1715, %v1711
        %v1717 = vrcp.pop %v1420
        %v1718 = vmul.f32 %v1420, %v1717
        %v1719 = vsub.f32 1.0, %v1718
        %v1720 = vmul.f32 %v1717, %v1719
        %v1721 = vadd.f32 %v1717, %v1720
        %vm1722 = vweird.f32 %v1420
        %vm1723 = vweird.f32 %v1717
        %vm1724 = vmor %vm1722, %vm1723
        %v1725 = vsel %vm1724, %v1717, %v1721
        %v1726 = vand.u32 2147483647, %v1420
        %vm1727 = vcmp.eq.f32.partialorder %v1726, 8.507059e+37
        %v1728 = vand.u32 %v1420, 2147483648
        %v1729 = vor.u32 1.1754944e-38, %v1728
        %v1730 = vsel %vm1727, %v1729, %v1725
        %v1731 = vrcp.pop %v1421
        %v1732 = vmul.f32 %v1421, %v1731
        %v1733 = vsub.f32 1.0, %v1732
        %v1734 = vmul.f32 %v1731, %v1733
        %v1735 = vadd.f32 %v1731, %v1734
        %vm1736 = vweird.f32 %v1421
        %vm1737 = vweird.f32 %v1731
        %vm1738 = vmor %vm1736, %vm1737
        %v1739 = vsel %vm1738, %v1731, %v1735
        %v1740 = vand.u32 2147483647, %v1421
        %vm1741 = vcmp.eq.f32.partialorder %v1740, 8.507059e+37
        %v1742 = vand.u32 %v1421, 2147483648
        %v1743 = vor.u32 1.1754944e-38, %v1742
        %v1744 = vsel %vm1741, %v1743, %v1739
        %v1745 = vrcp.pop %v1422
        %v1746 = vmul.f32 %v1422, %v1745
        %v1747 = vsub.f32 1.0, %v1746
        %v1748 = vmul.f32 %v1745, %v1747
        %v1749 = vadd.f32 %v1745, %v1748
        %vm1750 = vweird.f32 %v1422
        %vm1751 = vweird.f32 %v1745
        %vm1752 = vmor %vm1750, %vm1751
        %v1753 = vsel %vm1752, %v1745, %v1749
        %v1754 = vand.u32 2147483647, %v1422
        %vm1755 = vcmp.eq.f32.partialorder %v1754, 8.507059e+37
        %v1756 = vand.u32 %v1422, 2147483648
        %v1757 = vor.u32 1.1754944e-38, %v1756
        %v1758 = vsel %vm1755, %v1757, %v1753
        %v1759 = vrcp.pop %v1423
        %v1760 = vmul.f32 %v1423, %v1759
        %v1761 = vsub.f32 1.0, %v1760
        %v1762 = vmul.f32 %v1759, %v1761
        %v1763 = vadd.f32 %v1759, %v1762
        %vm1764 = vweird.f32 %v1423
        %vm1765 = vweird.f32 %v1759
        %vm1766 = vmor %vm1764, %vm1765
        %v1767 = vsel %vm1766, %v1759, %v1763
        %v1768 = vand.u32 2147483647, %v1423
        %vm1769 = vcmp.eq.f32.partialorder %v1768, 8.507059e+37
        %v1770 = vand.u32 %v1423, 2147483648
        %v1771 = vor.u32 1.1754944e-38, %v1770
        %v1772 = vsel %vm1769, %v1771, %v1767
        %v1773 = vrcp.pop %v1424
        %v1774 = vmul.f32 %v1424, %v1773
        %v1775 = vsub.f32 1.0, %v1774
        %v1776 = vmul.f32 %v1773, %v1775
        %v1777 = vadd.f32 %v1773, %v1776
        %vm1778 = vweird.f32 %v1424
        %vm1779 = vweird.f32 %v1773
        %vm1780 = vmor %vm1778, %vm1779
        %v1781 = vsel %vm1780, %v1773, %v1777
        %v1782 = vand.u32 2147483647, %v1424
        %vm1783 = vcmp.eq.f32.partialorder %v1782, 8.507059e+37
        %v1784 = vand.u32 %v1424, 2147483648
        %v1785 = vor.u32 1.1754944e-38, %v1784
        %v1786 = vsel %vm1783, %v1785, %v1781
        %v1787 = vrcp.pop %v1425
        %v1788 = vmul.f32 %v1425, %v1787
        %v1789 = vsub.f32 1.0, %v1788
        %v1790 = vmul.f32 %v1787, %v1789
        %v1791 = vadd.f32 %v1787, %v1790
        %vm1792 = vweird.f32 %v1425
        %vm1793 = vweird.f32 %v1787
        %vm1794 = vmor %vm1792, %vm1793
        %v1795 = vsel %vm1794, %v1787, %v1791
        %v1796 = vand.u32 2147483647, %v1425
        %vm1797 = vcmp.eq.f32.partialorder %v1796, 8.507059e+37
        %v1798 = vand.u32 %v1425, 2147483648
        %v1799 = vor.u32 1.1754944e-38, %v1798
        %v1800 = vsel %vm1797, %v1799, %v1795
        %v1801 = vrcp.pop %v1426
        %v1802 = vmul.f32 %v1426, %v1801
        %v1803 = vsub.f32 1.0, %v1802
        %v1804 = vmul.f32 %v1801, %v1803
        %v1805 = vadd.f32 %v1801, %v1804
        %vm1806 = vweird.f32 %v1426
        %vm1807 = vweird.f32 %v1801
        %vm1808 = vmor %vm1806, %vm1807
        %v1809 = vsel %vm1808, %v1801, %v1805
        %v1810 = vand.u32 2147483647, %v1426
        %vm1811 = vcmp.eq.f32.partialorder %v1810, 8.507059e+37
        %v1812 = vand.u32 %v1426, 2147483648
        %v1813 = vor.u32 1.1754944e-38, %v1812
        %v1814 = vsel %vm1811, %v1813, %v1809
        %v1815 = vrcp.pop %v1427
        %v1816 = vmul.f32 %v1427, %v1815
        %v1817 = vsub.f32 1.0, %v1816
        %v1818 = vmul.f32 %v1815, %v1817
        %v1819 = vadd.f32 %v1815, %v1818
        %vm1820 = vweird.f32 %v1427
        %vm1821 = vweird.f32 %v1815
        %vm1822 = vmor %vm1820, %vm1821
        %v1823 = vsel %vm1822, %v1815, %v1819
        %v1824 = vand.u32 2147483647, %v1427
        %vm1825 = vcmp.eq.f32.partialorder %v1824, 8.507059e+37
        %v1826 = vand.u32 %v1427, 2147483648
        %v1827 = vor.u32 1.1754944e-38, %v1826
        %v1828 = vsel %vm1825, %v1827, %v1823
        %v1829 = vrcp.pop %v1428
        %v1830 = vmul.f32 %v1428, %v1829
        %v1831 = vsub.f32 1.0, %v1830
        %v1832 = vmul.f32 %v1829, %v1831
        %v1833 = vadd.f32 %v1829, %v1832
        %vm1834 = vweird.f32 %v1428
        %vm1835 = vweird.f32 %v1829
        %vm1836 = vmor %vm1834, %vm1835
        %v1837 = vsel %vm1836, %v1829, %v1833
        %v1838 = vand.u32 2147483647, %v1428
        %vm1839 = vcmp.eq.f32.partialorder %v1838, 8.507059e+37
        %v1840 = vand.u32 %v1428, 2147483648
        %v1841 = vor.u32 1.1754944e-38, %v1840
        %v1842 = vsel %vm1839, %v1841, %v1837
        %v1843 = vrcp.pop %v1429
        %v1844 = vmul.f32 %v1429, %v1843
        %v1845 = vsub.f32 1.0, %v1844
        %v1846 = vmul.f32 %v1843, %v1845
        %v1847 = vadd.f32 %v1843, %v1846
        %vm1848 = vweird.f32 %v1429
        %vm1849 = vweird.f32 %v1843
        %vm1850 = vmor %vm1848, %vm1849
        %v1851 = vsel %vm1850, %v1843, %v1847
        %v1852 = vand.u32 2147483647, %v1429
        %vm1853 = vcmp.eq.f32.partialorder %v1852, 8.507059e+37
        %v1854 = vand.u32 %v1429, 2147483648
        %v1855 = vor.u32 1.1754944e-38, %v1854
        %v1856 = vsel %vm1853, %v1855, %v1851
        %v1857 = vrcp.pop %v1430
        %v1858 = vmul.f32 %v1430, %v1857
        %v1859 = vsub.f32 1.0, %v1858
        %v1860 = vmul.f32 %v1857, %v1859
        %v1861 = vadd.f32 %v1857, %v1860
        %vm1862 = vweird.f32 %v1430
        %vm1863 = vweird.f32 %v1857
        %vm1864 = vmor %vm1862, %vm1863
        %v1865 = vsel %vm1864, %v1857, %v1861
        %v1866 = vand.u32 2147483647, %v1430
        %vm1867 = vcmp.eq.f32.partialorder %v1866, 8.507059e+37
        %v1868 = vand.u32 %v1430, 2147483648
        %v1869 = vor.u32 1.1754944e-38, %v1868
        %v1870 = vsel %vm1867, %v1869, %v1865
        %v1871 = vrcp.pop %v1431
        %v1872 = vmul.f32 %v1431, %v1871
        %v1873 = vsub.f32 1.0, %v1872
        %v1874 = vmul.f32 %v1871, %v1873
        %v1875 = vadd.f32 %v1871, %v1874
        %vm1876 = vweird.f32 %v1431
        %vm1877 = vweird.f32 %v1871
        %vm1878 = vmor %vm1876, %vm1877
        %v1879 = vsel %vm1878, %v1871, %v1875
        %v1880 = vand.u32 2147483647, %v1431
        %vm1881 = vcmp.eq.f32.partialorder %v1880, 8.507059e+37
        %v1882 = vand.u32 %v1431, 2147483648
        %v1883 = vor.u32 1.1754944e-38, %v1882
        %v1884 = vsel %vm1881, %v1883, %v1879
        %v1885 = vrcp.pop %v1432
        %v1886 = vmul.f32 %v1432, %v1885
        %v1887 = vsub.f32 1.0, %v1886
        %v1888 = vmul.f32 %v1885, %v1887
        %v1889 = vadd.f32 %v1885, %v1888
        %vm1890 = vweird.f32 %v1432
        %vm1891 = vweird.f32 %v1885
        %vm1892 = vmor %vm1890, %vm1891
        %v1893 = vsel %vm1892, %v1885, %v1889
        %v1894 = vand.u32 2147483647, %v1432
        %vm1895 = vcmp.eq.f32.partialorder %v1894, 8.507059e+37
        %v1896 = vand.u32 %v1432, 2147483648
        %v1897 = vor.u32 1.1754944e-38, %v1896
        %v1898 = vsel %vm1895, %v1897, %v1893
        %v1899 = vmul.f32 %v1636, %v1688
        %v1900 = vmul.f32 %v1638, %v1702
        %v1901 = vmul.f32 %v1641, %v1716
        %v1902 = vmul.f32 %v1643, %v1730
        %v1903 = vmul.f32 %v1646, %v1744
        %v1904 = vmul.f32 %v1648, %v1758
        %v1905 = vmul.f32 %v1651, %v1772
        %v1906 = vmul.f32 %v1653, %v1786
        %v1907 = vmul.f32 %v1656, %v1800
        %v1908 = vmul.f32 %v1658, %v1814
        %v1909 = vmul.f32 %v1661, %v1828
        %v1910 = vmul.f32 %v1663, %v1842
        %v1911 = vmul.f32 %v1666, %v1856
        %v1912 = vmul.f32 %v1668, %v1870
        %v1913 = vmul.f32 %v1671, %v1884
        %v1914 = vmul.f32 %v1673, %v1898
        %v1915 = vld [vmem:[%s4] sm:$0x1]
        %v1917 = vperm.slane %v1915, 0
        %v1919 = vadd.f32 %v1899, %v1917
        %v1920 = vadd.f32 %v1900, %v1917
        %v1921 = vadd.f32 %v1901, %v1917
        %v1922 = vadd.f32 %v1902, %v1917
        %v1923 = vadd.f32 %v1903, %v1917
        %v1924 = vadd.f32 %v1904, %v1917
        %v1925 = vadd.f32 %v1905, %v1917
        %v1926 = vadd.f32 %v1906, %v1917
        %v1927 = vadd.f32 %v1907, %v1917
        %v1928 = vadd.f32 %v1908, %v1917
        %v1929 = vadd.f32 %v1909, %v1917
        %v1930 = vadd.f32 %v1910, %v1917
        %v1931 = vadd.f32 %v1911, %v1917
        %v1932 = vadd.f32 %v1912, %v1917
        %v1933 = vadd.f32 %v1913, %v1917
        %v1934 = vadd.f32 %v1914, %v1917
        %1935 = vst [vmem:[%s303] sm:$0xff] %v1919
        %1936 = vst [vmem:[%s303 + $0x8] sm:$0xff] %v1920
        %1937 = vst [vmem:[%s303 + $0x10] sm:$0xff] %v1921
        %1938 = vst [vmem:[%s303 + $0x18] sm:$0xff] %v1922
        %1939 = vst [vmem:[%s303 + $0x20] sm:$0xff] %v1923
        %1940 = vst [vmem:[%s303 + $0x28] sm:$0xff] %v1924
        %1941 = vst [vmem:[%s303 + $0x30] sm:$0xff] %v1925
        %1942 = vst [vmem:[%s303 + $0x38] sm:$0xff] %v1926
        %1943 = vst [vmem:[%s303 + $0x40] sm:$0xff] %v1927
        %1944 = vst [vmem:[%s303 + $0x48] sm:$0xff] %v1928
        %1945 = vst [vmem:[%s303 + $0x50] sm:$0xff] %v1929
        %1946 = vst [vmem:[%s303 + $0x58] sm:$0xff] %v1930
        %1947 = vst [vmem:[%s303 + $0x60] sm:$0xff] %v1931
        %1948 = vst [vmem:[%s303 + $0x68] sm:$0xff] %v1932
        %1949 = vst [vmem:[%s303 + $0x70] sm:$0xff] %v1933
        %1950 = vst [vmem:[%s303 + $0x78] sm:$0xff] %v1934
        %s1951 = sand.u32 %s161, 1
        %s1952 = scalar_lea.sflag [#allocation7], %s1951
        %s1953 = sand.u32 %s161, 1
        %s1954 = smul.addr %s1953, 128
        %s1955 = scalar_lea.vmem [#allocation11], %s1954
        // Predicated region
        $region61: #{tpu_custom_call.1} parent=43 // pred_check
          %p1956 = pneg %p171
        $region62: #{tpu_custom_call.1} parent=43 // pred_check_branch
          %1958 = sbr.rel (%p1956) target = $region64
        $region63: #{tpu_custom_call.1} parent=43 // pred_region
          %s1959 = smul.u32 16, %s22
          %1961 = vsyncadd %s1952, 0
          %s1962 = smul.addr %s1959, 8
          %s1963 = scalar_lea.hbm %s6, %s1962
          %s1964 = sshll.u32 %s1955, 4
          %s1965 = int_to_ptr.vmem [resolvable:$true] %s1964
          %s1966 = sshll.u32 %s1963, 4
          %s1967 = int_to_ptr.hbm [resolvable:$true] %s1966
          %1972 = dma.vmem_to_hbm [thread:$0]  %s1965, 2048, %s1967, %s1952, 128, 128, 8
        $region64: #{tpu_custom_call.1} parent=43 // pred_fallthru
          _
      $region44: #{tpu_custom_call.1} parent=5 // pred_fallthru
        _
      %p1973 = scmp.le.s32.totalorder 2, %s17
      // Predicated region
      $region65: #{tpu_custom_call.1} parent=5 // pred_check
        %p1974 = pneg %p1973
      $region66: #{tpu_custom_call.1} parent=5 // pred_check_branch
        %1976 = sbr.rel (%p1974) target = $region68
      $region67: #{tpu_custom_call.1} parent=5 // pred_region
        %s1977 = ssub.s32 %s17, 2
        // Predicated region
        $region69: #{tpu_custom_call.1} parent=67 // pred_check
          %p1978 = pneg %p177
        $region70: #{tpu_custom_call.1} parent=67 // pred_check_branch
          %1980 = sbr.rel (%p1978) target = $region72
        $region71: #{tpu_custom_call.1} parent=67 // pred_region
          %s1981 = sand.u32 %s162, 1
          %s1982 = scalar_lea.sflag [#allocation7], %s1981
          %s1983 = sand.u32 %s162, 1
          %s1984 = smul.addr %s1983, 128
          %s1985 = scalar_lea.vmem [#allocation11], %s1984
          %1987 = dma.done %s1982, 2048
        $region72: #{tpu_custom_call.1} parent=67 // pred_fallthru
          _
      $region68: #{tpu_custom_call.1} parent=5 // pred_fallthru
        _
    $region6: #{tpu_custom_call.1} parent=1 // loop_footer
      %s21 = sadd.s32 1, %s17
    $region7: #{tpu_custom_call.1} parent=1 // loop_footer_branch
      %16 = sbr.rel target = $region3
    $region8: #{tpu_custom_call.1} parent=1 // loop_exit
      _
    %1988 = vsyncpa [#allocation6], 1
    %s1989 = scalar_lea.sflag [#allocation6], 1
    %1990 = vsyncpa %s1989, 1
    %1991 = vsyncpa [#allocation9], 1
    %1992 = vsyncpa [#allocation7], 1
    %s1993 = scalar_lea.sflag [#allocation7], 1
    %1994 = vsyncpa %s1993, 1

</llo_original>
